<compile_context>
chip_gen: v5e
topology: v5e:2x2
jax: 0.10.0
libtpu: 0.0.40
codegen_flags: <defaults>
</compile_context>

<pallas_src>
import functools
import math

import jax
import jax.numpy as jnp
from jax import lax
from jax.experimental import pallas as pl
from jax.experimental.pallas import tpu as pltpu

_INV_SQRT2 = 0.7071067811865476
_LN_EPS = 1e-5
# Scoped-VMEM limit: above the 16/32 MiB defaults, safely under v7x's 64 MiB
# physical VMEM.  (v5e / v6e can raise this toward ~100 MiB.)
_DEFAULT_VMEM_LIMIT = 48 * 1024 * 1024


# ----------------------------- in-kernel helpers -----------------------------

def _layernorm(x, g, b):
    mean = jnp.mean(x, axis=-1, keepdims=True)
    var = jnp.mean((x - mean) ** 2, axis=-1, keepdims=True)
    return (x - mean) * lax.rsqrt(var + _LN_EPS) * g + b


def _gelu(x):
    # exact (erf-based) GELU, matching torch.nn.GELU() default.
    # TODO(synk): switch to tanh-approx GELU (EUP slot) if VALU-bound.
    return 0.5 * x * (1.0 + lax.erf(x * _INV_SQRT2))


def _round_up(n, m):
    return ((n + m - 1) // m) * m


def _pad_cols(a, target):
    return jnp.pad(a, ((0, 0), (0, target - a.shape[1])))


# --------------------------------- kernels -----------------------------------

def fused_mixer_kernel(x_ref, lnp_ref, tw1t_ref, tb1_ref, tw2t_ref, tb2_ref,
                       cw1_ref, cb1_ref, cw2_ref, cb2_ref, pooled_ref, act_sc,
                       *, pool):
    """One (batch-tile, layer) grid step; activation stays resident in act_sc (f32).

    The last layer also emits the pooled (Bt, D) features (mean over tokens or the
    cls token), so the full (B, N, D) activation never round-trips through HBM.
    """
    l = pl.program_id(1)
    n_layers = pl.num_programs(1)

    @pl.when(l == 0)
    def _():
        act_sc[...] = x_ref[...].astype(jnp.float32)

    x = act_sc[...]                                    # (Bt, N, D), f32
    bt, n, d = x.shape
    lnp = lnp_ref[0].astype(jnp.float32)               # (4, D): tg, tb, cg, cb

    # ---- TokenMixer: LN -> W1^T @ xcat -> GELU -> W2^T @ h, residual ----------
    # The batch tile is concatenated along lanes so each projection is ONE big MXU
    # matmul (weight pushed once per layer, not once per batch element).
    xn = _layernorm(x, lnp[0:1], lnp[1:2])                               # (Bt, N, D)
    xcat = jnp.concatenate([xn[b] for b in range(bt)], axis=1)           # (N, Bt*D)
    tw1t = tw1t_ref[0]                                                   # (H, N)
    tw2t = tw2t_ref[0]                                                   # (N, H)
    h = _gelu(jnp.dot(tw1t, xcat.astype(tw1t.dtype),
                      preferred_element_type=jnp.float32)
              + tb1_ref[0].astype(jnp.float32))                          # (H, Bt*D)
    y = (jnp.dot(tw2t, h.astype(tw2t.dtype),
                 preferred_element_type=jnp.float32)
         + tb2_ref[0].astype(jnp.float32))                               # (N, Bt*D)
    ymix = jnp.stack([y[:, b * d:(b + 1) * d] for b in range(bt)], axis=0)
    x = x + ymix                                                         # (Bt, N, D)

    # ---- ChannelMixer: LN -> Linear(D->H) -> GELU -> Linear(H->D), residual ---
    xn = _layernorm(x, lnp[2:3], lnp[3:4])
    flat = xn.reshape(bt * n, d)                       # fill the MXU M dimension
    cw1 = cw1_ref[0]
    cw2 = cw2_ref[0]
    h = _gelu(jnp.dot(flat.astype(cw1.dtype), cw1,
                      preferred_element_type=jnp.float32)
              + cb1_ref[0].astype(jnp.float32))        # (Bt*N, H)
    y = (jnp.dot(h.astype(cw2.dtype), cw2,
                 preferred_element_type=jnp.float32)
         + cb2_ref[0].astype(jnp.float32))             # (Bt*N, D)
    x = x + y.reshape(bt, n, d)
    act_sc[...] = x                                    # one dense store per layer

    @pl.when(l == n_layers - 1)
    def _():
        p = jnp.mean(x, axis=1) if pool == "mean" else x[:, 0, :]
        pooled_ref[...] = p.astype(pooled_ref.dtype)


def head_domain_kernel(p_ref, hln_ref, hw_ref, hb_ref,
                       dln_ref, dw1_ref, db1_ref, dw2_ref, db2_ref,
                       dw3_ref, db3_ref,
                       logits_ref, dom_ref, pdom_sc, acc_sc):
    """Classifier head + domain predictor on pooled (B, D) features.

    The grid walks the 4096-wide domain hidden layer (K-tiled); the classifier
    logits are computed once at k == 0.
    """
    k = pl.program_id(0)

    @pl.when(k == 0)
    def _():
        p = p_ref[...].astype(jnp.float32)             # (B, D)
        hln = hln_ref[...].astype(jnp.float32)         # (2, D)
        pn = _layernorm(p, hln[0:1], hln[1:2])
        logits_ref[...] = (jnp.dot(pn.astype(hw_ref.dtype), hw_ref[...],
                                   preferred_element_type=jnp.float32)
                           + hb_ref[...].astype(jnp.float32)).astype(logits_ref.dtype)
        dln = dln_ref[...].astype(jnp.float32)
        pdom_sc[...] = _layernorm(p, dln[0:1], dln[1:2])
        acc_sc[...] = jnp.zeros_like(acc_sc)

    # domain hidden layer, K-tiled over the 4096 dim
    h1 = _gelu(jnp.dot(pdom_sc[...].astype(dw1_ref.dtype), dw1_ref[...],
                       preferred_element_type=jnp.float32)
               + db1_ref[...].astype(jnp.float32))     # (B, tk)
    acc_sc[...] += jnp.dot(h1.astype(dw2_ref.dtype), dw2_ref[...],
                           preferred_element_type=jnp.float32)

    @pl.when(k == pl.num_programs(0) - 1)
    def _():
        h2 = _gelu(acc_sc[...] + db2_ref[...].astype(jnp.float32))   # (B, 1024)
        dom_ref[...] = (jnp.dot(h2.astype(dw3_ref.dtype), dw3_ref[...],
                                preferred_element_type=jnp.float32)
                        + db3_ref[...].astype(jnp.float32)).astype(dom_ref.dtype)


def head_kernel(p_ref, hln_ref, hw_ref, hb_ref, logits_ref):
    """Classifier-only head on pooled (B, D) features ('test' mode / no domain)."""
    p = p_ref[...].astype(jnp.float32)
    hln = hln_ref[...].astype(jnp.float32)
    pn = _layernorm(p, hln[0:1], hln[1:2])
    logits_ref[...] = (jnp.dot(pn.astype(hw_ref.dtype), hw_ref[...],
                               preferred_element_type=jnp.float32)
                       + hb_ref[...].astype(jnp.float32)).astype(logits_ref.dtype)


# ------------------------------ pallas wrappers -------------------------------

def _pick_batch_tile(B, N, D, H, weight_bytes, vmem_budget, batch_tile=None):
    """Largest batch tile that (a) divides B, (b) keeps the pooled output block
    sublane-aligned (Bt == B or Bt % 8 == 0), and (c) fits the VMEM budget.
    A larger Bt amortizes the per-layer weight streaming (nb == 1 ideal)."""
    cands = [bt for bt in range(1, B + 1)
             if B % bt == 0 and (bt == B or bt % 8 == 0)]
    if batch_tile is not None:
        capped = [bt for bt in cands if bt <= batch_tile]
        cands = capped or cands[:1]

    def fits(bt):
        est = (4 * bt * N * D * 3                       # resident f32 act + x block
               + 4 * bt * max(N, D) * H * 2             # token/channel hidden activations
               + 2 * weight_bytes * 2 * H * (N + D))    # double-buffered layer weights
        return est <= (vmem_budget * 3) // 4

    fitting = [bt for bt in cands if fits(bt)]
    return max(fitting) if fitting else min(cands)


def fused_mixer_pooled(x, params, pool, *, weights_dtype=jnp.bfloat16,
                       batch_tile=None, vmem_limit_bytes=_DEFAULT_VMEM_LIMIT):
    """All mixer layers + pooling in one pallas_call; returns pooled (B, D) f32."""
    B, N, D = x.shape
    layers = params["layers"]
    L = len(layers)
    H = layers[0]["tw1"].shape[1]
    wdt = weights_dtype if weights_dtype is not None else jnp.float32

    # Stack per-layer params along a leading L axis (token-mixer weights are
    # pre-transposed so the kernel issues only plain weight-left MXU matmuls).
    lnp = jnp.stack([jnp.concatenate(
        [l_["tln_g"], l_["tln_b"], l_["cln_g"], l_["cln_b"]], axis=0)
        for l_ in layers])                                        # (L, 4, D)
    tw1t = jnp.stack([l_["tw1"].T for l_ in layers]).astype(wdt)  # (L, H, N)
    tb1c = jnp.stack([l_["tb1"].T for l_ in layers])              # (L, H, 1)
    tw2t = jnp.stack([l_["tw2"].T for l_ in layers]).astype(wdt)  # (L, N, H)
    tb2c = jnp.stack([l_["tb2"].T for l_ in layers])              # (L, N, 1)
    cw1 = jnp.stack([l_["cw1"] for l_ in layers]).astype(wdt)     # (L, D, H)
    cb1 = jnp.stack([l_["cb1"] for l_ in layers])                 # (L, 1, H)
    cw2 = jnp.stack([l_["cw2"] for l_ in layers]).astype(wdt)     # (L, H, D)
    cb2 = jnp.stack([l_["cb2"] for l_ in layers])                 # (L, 1, D)

    Bt = _pick_batch_tile(B, N, D, H, jnp.dtype(wdt).itemsize,
                          vmem_limit_bytes, batch_tile)
    nb = B // Bt
    # TODO(synk): on v7x prefer nb == 2 so both TensorCores get a batch block.

    def lspec(s1, s2):
        return pl.BlockSpec((1, s1, s2), lambda b, l: (l, 0, 0))

    return pl.pallas_call(
        functools.partial(fused_mixer_kernel, pool=pool),
        out_shape=jax.ShapeDtypeStruct((B, D), jnp.float32),
        grid=(nb, L),
        in_specs=[
            pl.BlockSpec((Bt, N, D), lambda b, l: (b, 0, 0)),
            lspec(4, D),
            lspec(H, N), lspec(H, 1), lspec(N, H), lspec(N, 1),
            lspec(D, H), lspec(1, H), lspec(H, D), lspec(1, D),
        ],
        out_specs=pl.BlockSpec((Bt, D), lambda b, l: (b, 0)),
        scratch_shapes=[pltpu.VMEM((Bt, N, D), jnp.float32)],
        compiler_params=pltpu.CompilerParams(
            dimension_semantics=("parallel", "arbitrary"),
            vmem_limit_bytes=vmem_limit_bytes),
    )(x, lnp, tw1t, tb1c, tw2t, tb2c, cw1, cb1, cw2, cb2)


def head_and_domain(pooled, params, *, weights_dtype=jnp.bfloat16, tk=512,
                    vmem_limit_bytes=_DEFAULT_VMEM_LIMIT):
    """Merged classifier + domain predictor on the pooled (B, D) features."""
    B, D = pooled.shape
    wdt = weights_dtype if weights_dtype is not None else jnp.float32
    C = params["head_w"].shape[1]
    DN = params["dw3"].shape[1]
    H1 = params["dw1"].shape[1]
    H2 = params["dw2"].shape[1]
    Cp = _round_up(C, 128)      # lane-dense classifier output
    DNp = _round_up(DN, 128)    # lane-dense domain output

    hln = jnp.concatenate([params["head_ln_g"], params["head_ln_b"]], axis=0)  # (2, D)
    dln = jnp.concatenate([params["dom_ln_g"], params["dom_ln_b"]], axis=0)    # (2, D)
    hw = _pad_cols(params["head_w"], Cp).astype(wdt)
    hb = _pad_cols(params["head_b"], Cp)
    dw1 = params["dw1"].astype(wdt)
    db1 = params["db1"]
    dw2 = params["dw2"].astype(wdt)
    db2 = params["db2"]
    dw3 = _pad_cols(params["dw3"], DNp).astype(wdt)
    db3 = _pad_cols(params["db3"], DNp)

    tk = min(tk, H1)
    while H1 % tk:
        tk -= 1                 # largest K-tile that divides the 4096-wide hidden
    K = H1 // tk
    # TODO(synk): on v7x, give this kernel a parallel batch/column axis for megacore.

    logits_p, dom_p = pl.pallas_call(
        head_domain_kernel,
        out_shape=(jax.ShapeDtypeStruct((B, Cp), jnp.float32),
                   jax.ShapeDtypeStruct((B, DNp), jnp.float32)),
        grid=(K,),
        in_specs=[
            pl.BlockSpec((B, D), lambda k: (0, 0)),
            pl.BlockSpec((2, D), lambda k: (0, 0)),
            pl.BlockSpec((D, Cp), lambda k: (0, 0)),
            pl.BlockSpec((1, Cp), lambda k: (0, 0)),
            pl.BlockSpec((2, D), lambda k: (0, 0)),
            pl.BlockSpec((D, tk), lambda k: (0, k)),
            pl.BlockSpec((1, tk), lambda k: (0, k)),
            pl.BlockSpec((tk, H2), lambda k: (k, 0)),
            pl.BlockSpec((1, H2), lambda k: (0, 0)),
            pl.BlockSpec((H2, DNp), lambda k: (0, 0)),
            pl.BlockSpec((1, DNp), lambda k: (0, 0)),
        ],
        out_specs=(pl.BlockSpec((B, Cp), lambda k: (0, 0)),
                   pl.BlockSpec((B, DNp), lambda k: (0, 0))),
        scratch_shapes=[pltpu.VMEM((B, D), jnp.float32),
                        pltpu.VMEM((B, H2), jnp.float32)],
        compiler_params=pltpu.CompilerParams(
            dimension_semantics=("arbitrary",),
            vmem_limit_bytes=vmem_limit_bytes),
    )(pooled, hln, hw, hb, dln, dw1, db1, dw2, db2, dw3, db3)
    return logits_p[:, :C], dom_p[:, :DN]


def classifier_head(pooled, params, *, weights_dtype=jnp.bfloat16,
                    vmem_limit_bytes=_DEFAULT_VMEM_LIMIT):
    B, D = pooled.shape
    wdt = weights_dtype if weights_dtype is not None else jnp.float32
    C = params["head_w"].shape[1]
    Cp = _round_up(C, 128)
    hln = jnp.concatenate([params["head_ln_g"], params["head_ln_b"]], axis=0)
    hw = _pad_cols(params["head_w"], Cp).astype(wdt)
    hb = _pad_cols(params["head_b"], Cp)
    # Inputs are only the pooled (B, D) features + tiny head weights, so whole-array
    # VMEM residency (default specs, no grid) is fine here.
    logits_p = pl.pallas_call(
        head_kernel,
        out_shape=jax.ShapeDtypeStruct((B, Cp), jnp.float32),
        compiler_params=pltpu.CompilerParams(vmem_limit_bytes=vmem_limit_bytes),
    )(pooled, hln, hw, hb)
    return logits_p[:, :C]


def proto_mixer_forward(x, params, *, mode, DA_rate, pool, domain_num,
                        weights_dtype=jnp.bfloat16, batch_tile=None,
                        domain_tk=512, vmem_limit_bytes=_DEFAULT_VMEM_LIMIT):
    attention = 0
    pooled = fused_mixer_pooled(x, params, pool, weights_dtype=weights_dtype,
                                batch_tile=batch_tile,
                                vmem_limit_bytes=vmem_limit_bytes)
    if mode == "train":
        if domain_num > 0:
            # AdaptiveGradReverse is identity in the forward pass.
            result, domain_prob = head_and_domain(
                pooled, params, weights_dtype=weights_dtype, tk=domain_tk,
                vmem_limit_bytes=vmem_limit_bytes)
            return result, domain_prob, attention
        result = classifier_head(pooled, params, weights_dtype=weights_dtype,
                                 vmem_limit_bytes=vmem_limit_bytes)
        return result, None, attention
    elif mode == "test":
        result = classifier_head(pooled, params, weights_dtype=weights_dtype,
                                 vmem_limit_bytes=vmem_limit_bytes)
        return result, attention


# ---------------------------- parameter construction --------------------------

def init_params(key, token_dim, num_tokens, hidden_dim, num_layers,
                num_classes, domain_num):
    # Deterministic synthetic init mirroring nn.Linear's default (uniform +-1/sqrt(fan_in)).
    # Weights are stored as (fan_in, fan_out); biases as (1, fan_out).
    def linear(k, fan_in, fan_out):
        k1, k2 = jax.random.split(k)
        bound = 1.0 / math.sqrt(fan_in)
        w = jax.random.uniform(k1, (fan_in, fan_out), jnp.float32, -bound, bound)
        b = jax.random.uniform(k2, (1, fan_out), jnp.float32, -bound, bound)
        return w, b

    keys = jax.random.split(key, 4 * num_layers + 4)
    params = {"layers": []}
    ki = 0
    for _ in range(num_layers):
        tw1, tb1 = linear(keys[ki], num_tokens, hidden_dim); ki += 1
        tw2, tb2 = linear(keys[ki], hidden_dim, num_tokens); ki += 1
        cw1, cb1 = linear(keys[ki], token_dim, hidden_dim);  ki += 1
        cw2, cb2 = linear(keys[ki], hidden_dim, token_dim);  ki += 1
        params["layers"].append(dict(
            tln_g=jnp.ones((1, token_dim), jnp.float32),
            tln_b=jnp.zeros((1, token_dim), jnp.float32),
            tw1=tw1, tb1=tb1, tw2=tw2, tb2=tb2,
            cln_g=jnp.ones((1, token_dim), jnp.float32),
            cln_b=jnp.zeros((1, token_dim), jnp.float32),
            cw1=cw1, cb1=cb1, cw2=cw2, cb2=cb2,
        ))
    hw, hb = linear(keys[ki], token_dim, num_classes); ki += 1
    params.update(head_ln_g=jnp.ones((1, token_dim), jnp.float32),
                  head_ln_b=jnp.zeros((1, token_dim), jnp.float32),
                  head_w=hw, head_b=hb)
    dw1, db1 = linear(keys[ki], token_dim, 4096); ki += 1
    dw2, db2 = linear(keys[ki], 4096, 1024); ki += 1
    dw3, db3 = linear(keys[ki], 1024, domain_num); ki += 1
    params.update(dom_ln_g=jnp.ones((1, token_dim), jnp.float32),
                  dom_ln_b=jnp.zeros((1, token_dim), jnp.float32),
                  dw1=dw1, db1=db1, dw2=dw2, db2=db2, dw3=dw3, db3=db3)
    return params


# ----------------------------- pure-JAX reference ------------------------------

def reference_forward(x, params, pool):
    gelu = lambda v: jax.nn.gelu(v, approximate=False)

    def ln(v, g, b):
        m = v.mean(-1, keepdims=True)
        var = ((v - m) ** 2).mean(-1, keepdims=True)
        return (v - m) / jnp.sqrt(var + _LN_EPS) * g + b

    for lyr in params["layers"]:
        res = x
        v = ln(x, lyr["tln_g"][0], lyr["tln_b"][0])
        v = jnp.swapaxes(v, 1, 2)
        v = gelu(v @ lyr["tw1"] + lyr["tb1"][0])
        v = v @ lyr["tw2"] + lyr["tb2"][0]
        x = jnp.swapaxes(v, 1, 2) + res
        v = ln(x, lyr["cln_g"][0], lyr["cln_b"][0])
        v = gelu(v @ lyr["cw1"] + lyr["cb1"][0])
        x = x + (v @ lyr["cw2"] + lyr["cb2"][0])
    p = x.mean(1) if pool == "mean" else x[:, 0]
    logits = ln(p, params["head_ln_g"][0], params["head_ln_b"][0]) @ params["head_w"] + params["head_b"][0]
    d = ln(p, params["dom_ln_g"][0], params["dom_ln_b"][0])
    d = gelu(d @ params["dw1"] + params["db1"][0])
    d = gelu(d @ params["dw2"] + params["db2"][0])
    d = d @ params["dw3"] + params["db3"][0]
    return logits, d


# ------------------------------------ main -------------------------------------

if __name__ == "__main__":
    B, num_tokens, token_dim, hidden_dim = 2, 8, 32, 32
    num_layers, num_classes, domain_num = 2, 10, 3
    pool = "mean"

    key = jax.random.PRNGKey(0)
    kx, kp = jax.random.split(key)
    x = jax.random.normal(kx, (B, num_tokens, token_dim), jnp.float32)
    params = init_params(kp, token_dim, num_tokens, hidden_dim,
                         num_layers, num_classes, domain_num)

    ref_logits, ref_domain = reference_forward(x, params, pool)

    # ---- f32 path (exact numerics) ----
    result, domain_prob, attention = proto_mixer_forward(
        x, params, mode="train", DA_rate=0.5, pool=pool, domain_num=domain_num,
        weights_dtype=jnp.float32)
    jax.block_until_ready((result, domain_prob))
    assert result.shape == (B, num_classes) and domain_prob.shape == (B, domain_num)
    assert jnp.allclose(result, ref_logits, atol=5e-3, rtol=5e-3)
    assert jnp.allclose(domain_prob, ref_domain, atol=5e-3, rtol=5e-3)

    # ---- 'test' mode path (classifier only) ----
    test_result, test_attention = proto_mixer_forward(
        x, params, mode="test", DA_rate=0.0, pool=pool, domain_num=domain_num,
        weights_dtype=jnp.float32)
    jax.block_until_ready(test_result)
    assert jnp.allclose(test_result, ref_logits, atol=5e-3, rtol=5e-3)

    # ---- default bf16-weight path (MXU-native on v5e/v6e/v7x); loose tolerance ----
    bf_result, bf_domain, _ = proto_mixer_forward(
        x, params, mode="train", DA_rate=0.5, pool=pool, domain_num=domain_num)
    jax.block_until_ready((bf_result, bf_domain))
    assert jnp.allclose(bf_result, ref_logits, atol=1e-1, rtol=1e-1)
    assert jnp.allclose(bf_domain, ref_domain, atol=1e-1, rtol=1e-1)

    print("KERNEL_OK")
</pallas_src>

<mosaic_0001>
module attributes {stable_mosaic.version = 11 : i64} {
  func.func @fused_mixer_kernel(%arg0: i32, %arg1: i32, %arg2: memref<2x8x32xf32, #tpu.memory_space<vmem>>, %arg3: memref<1x4x32xf32, #tpu.memory_space<vmem>>, %arg4: memref<1x32x8xf32, #tpu.memory_space<vmem>>, %arg5: memref<1x32x1xf32, #tpu.memory_space<vmem>>, %arg6: memref<1x8x32xf32, #tpu.memory_space<vmem>>, %arg7: memref<1x8x1xf32, #tpu.memory_space<vmem>>, %arg8: memref<1x32x32xf32, #tpu.memory_space<vmem>>, %arg9: memref<1x1x32xf32, #tpu.memory_space<vmem>>, %arg10: memref<1x32x32xf32, #tpu.memory_space<vmem>>, %arg11: memref<1x1x32xf32, #tpu.memory_space<vmem>>, %arg12: memref<2x32xf32, #tpu.memory_space<vmem>>, %arg13: memref<2x8x32xf32, #tpu.memory_space<vmem>>) attributes {dimension_semantics = [#tpu.dimension_semantics<parallel>, #tpu.dimension_semantics<arbitrary>], iteration_bounds = array<i64: 1, 2>, scalar_prefetch = 0 : i64, scratch_operands = 1 : i64, tpu.core_type = #tpu.core_type<tc>, window_params = [{transform_indices = @transform_0, window_bounds = array<i64: 2, 8, 32>}, {transform_indices = @transform_1, window_bounds = array<i64: 1, 4, 32>}, {transform_indices = @transform_2, window_bounds = array<i64: 1, 32, 8>}, {transform_indices = @transform_3, window_bounds = array<i64: 1, 32, 1>}, {transform_indices = @transform_4, window_bounds = array<i64: 1, 8, 32>}, {transform_indices = @transform_5, window_bounds = array<i64: 1, 8, 1>}, {transform_indices = @transform_6, window_bounds = array<i64: 1, 32, 32>}, {transform_indices = @transform_7, window_bounds = array<i64: 1, 1, 32>}, {transform_indices = @transform_8, window_bounds = array<i64: 1, 32, 32>}, {transform_indices = @transform_9, window_bounds = array<i64: 1, 1, 32>}, {transform_indices = @transform_10, window_bounds = array<i64: 2, 32>}]} {
    %c0_i32 = arith.constant 0 : i32
    %0 = arith.cmpi eq, %arg1, %c0_i32 : i32
    %1 = arith.extui %0 : i1 to i32
    %c0_i32_0 = arith.constant 0 : i32
    %2 = arith.cmpi ne, %1, %c0_i32_0 : i32
    scf.if %2 {
      %c0_53 = arith.constant 0 : index
      %c0_54 = arith.constant 0 : index
      %c0_55 = arith.constant 0 : index
      %120 = vector.load %arg2[%c0_53, %c0_54, %c0_55] : memref<2x8x32xf32, #tpu.memory_space<vmem>>, vector<2x8x32xf32>
      %c0_56 = arith.constant 0 : index
      %c0_57 = arith.constant 0 : index
      %c0_58 = arith.constant 0 : index
      %121 = vector.load %arg13[%c0_56, %c0_57, %c0_58] : memref<2x8x32xf32, #tpu.memory_space<vmem>>, vector<2x8x32xf32>
      tpu.vector_store %arg13[%c0_56, %c0_57, %c0_58], %120 {strides = array<i32>} : memref<2x8x32xf32, #tpu.memory_space<vmem>>, vector<2x8x32xf32>,
    } else {
    }
    %c0 = arith.constant 0 : index
    %c0_1 = arith.constant 0 : index
    %c0_2 = arith.constant 0 : index
    %3 = vector.load %arg13[%c0, %c0_1, %c0_2] : memref<2x8x32xf32, #tpu.memory_space<vmem>>, vector<2x8x32xf32>
    %c0_3 = arith.constant 0 : index
    %c0_4 = arith.constant 0 : index
    %c0_5 = arith.constant 0 : index
    %4 = vector.load %arg3[%c0_3, %c0_4, %c0_5] : memref<1x4x32xf32, #tpu.memory_space<vmem>>, vector<1x4x32xf32>
    %5 = vector.shape_cast %4 : vector<1x4x32xf32> to vector<4x32xf32>
    %6 = vector.extract_strided_slice %5 {offsets = [0, 0], sizes = [1, 32], strides = [1, 1]} : vector<4x32xf32> to vector<1x32xf32>
    %7 = vector.extract_strided_slice %5 {offsets = [1, 0], sizes = [1, 32], strides = [1, 1]} : vector<4x32xf32> to vector<1x32xf32>
    %cst = arith.constant dense<0.000000e+00> : vector<2x8xf32>
    %8 = vector.multi_reduction <add>, %3, %cst [2] : vector<2x8x32xf32> to vector<2x8xf32>
    %9 = vector.shape_cast %8 : vector<2x8xf32> to vector<2x8x1xf32>
    %cst_6 = arith.constant 3.200000e+01 : f32
    %10 = vector.broadcast %cst_6 : f32 to vector<2x8x1xf32>
    %11 = arith.divf %9, %10 : vector<2x8x1xf32>
    %12 = vector.broadcast %11 : vector<2x8x1xf32> to vector<2x8x32xf32>
    %13 = arith.subf %3, %12 : vector<2x8x32xf32>
    %14 = arith.mulf %13, %13 : vector<2x8x32xf32>
    %cst_7 = arith.constant dense<0.000000e+00> : vector<2x8xf32>
    %15 = vector.multi_reduction <add>, %14, %cst_7 [2] : vector<2x8x32xf32> to vector<2x8xf32>
    %16 = vector.shape_cast %15 : vector<2x8xf32> to vector<2x8x1xf32>
    %cst_8 = arith.constant 3.200000e+01 : f32
    %17 = vector.broadcast %cst_8 : f32 to vector<2x8x1xf32>
    %18 = arith.divf %16, %17 : vector<2x8x1xf32>
    %19 = vector.broadcast %11 : vector<2x8x1xf32> to vector<2x8x32xf32>
    %20 = arith.subf %3, %19 : vector<2x8x32xf32>
    %cst_9 = arith.constant 9.99999974E-6 : f32
    %21 = vector.broadcast %cst_9 : f32 to vector<2x8x1xf32>
    %22 = arith.addf %18, %21 : vector<2x8x1xf32>
    %23 = math.rsqrt %22 : vector<2x8x1xf32>
    %24 = vector.broadcast %23 : vector<2x8x1xf32> to vector<2x8x32xf32>
    %25 = arith.mulf %20, %24 : vector<2x8x32xf32>
    %26 = vector.shape_cast %6 : vector<1x32xf32> to vector<1x1x32xf32>
    %27 = vector.broadcast %26 : vector<1x1x32xf32> to vector<2x8x32xf32>
    %28 = arith.mulf %25, %27 : vector<2x8x32xf32>
    %29 = vector.shape_cast %7 : vector<1x32xf32> to vector<1x1x32xf32>
    %30 = vector.broadcast %29 : vector<1x1x32xf32> to vector<2x8x32xf32>
    %31 = arith.addf %28, %30 : vector<2x8x32xf32>
    %32 = vector.extract_strided_slice %31 {offsets = [0, 0, 0], sizes = [1, 8, 32], strides = [1, 1, 1]} : vector<2x8x32xf32> to vector<1x8x32xf32>
    %33 = vector.shape_cast %32 : vector<1x8x32xf32> to vector<8x32xf32>
    %34 = vector.extract_strided_slice %31 {offsets = [1, 0, 0], sizes = [1, 8, 32], strides = [1, 1, 1]} : vector<2x8x32xf32> to vector<1x8x32xf32>
    %35 = vector.shape_cast %34 : vector<1x8x32xf32> to vector<8x32xf32>
    %36 = tpu.concatenate %33, %35 in 1 : vector<8x32xf32>, vector<8x32xf32> -> vector<8x64xf32>
    %c0_10 = arith.constant 0 : index
    %c0_11 = arith.constant 0 : index
    %c0_12 = arith.constant 0 : index
    %37 = vector.load %arg4[%c0_10, %c0_11, %c0_12] : memref<1x32x8xf32, #tpu.memory_space<vmem>>, vector<1x32x8xf32>
    %38 = vector.shape_cast %37 : vector<1x32x8xf32> to vector<32x8xf32>
    %c0_13 = arith.constant 0 : index
    %c0_14 = arith.constant 0 : index
    %c0_15 = arith.constant 0 : index
    %39 = vector.load %arg6[%c0_13, %c0_14, %c0_15] : memref<1x8x32xf32, #tpu.memory_space<vmem>>, vector<1x8x32xf32>
    %40 = vector.shape_cast %39 : vector<1x8x32xf32> to vector<8x32xf32>
    %cst_16 = arith.constant dense<0.000000e+00> : vector<32x64xf32>
    %41 = tpu.matmul %38, %36, %cst_16 {dimension_numbers = #tpu.dot_dimension_numbers<[1], [0], [0], [1], [0, 0, 1, 1], [], []>} : vector<32x8xf32>, vector<8x64xf32>, vector<32x64xf32> -> vector<32x64xf32>
    %c0_17 = arith.constant 0 : index
    %c0_18 = arith.constant 0 : index
    %c0_19 = arith.constant 0 : index
    %42 = vector.load %arg5[%c0_17, %c0_18, %c0_19] : memref<1x32x1xf32, #tpu.memory_space<vmem>>, vector<1x32x1xf32>
    %43 = vector.shape_cast %42 : vector<1x32x1xf32> to vector<32x1xf32>
    %44 = vector.broadcast %43 : vector<32x1xf32> to vector<32x64xf32>
    %45 = arith.addf %41, %44 : vector<32x64xf32>
    %cst_20 = arith.constant 5.000000e-01 : f32
    %46 = vector.broadcast %cst_20 : f32 to vector<32x64xf32>
    %47 = arith.mulf %46, %45 : vector<32x64xf32>
    %cst_21 = arith.constant 0.707106769 : f32
    %48 = vector.broadcast %cst_21 : f32 to vector<32x64xf32>
    %49 = arith.mulf %45, %48 : vector<32x64xf32>
    %50 = math.erf %49 : vector<32x64xf32>
    %cst_22 = arith.constant 1.000000e+00 : f32
    %51 = vector.broadcast %cst_22 : f32 to vector<32x64xf32>
    %52 = arith.addf %51, %50 : vector<32x64xf32>
    %53 = arith.mulf %47, %52 : vector<32x64xf32>
    %cst_23 = arith.constant dense<0.000000e+00> : vector<8x64xf32>
    %54 = tpu.matmul %40, %53, %cst_23 {dimension_numbers = #tpu.dot_dimension_numbers<[1], [0], [0], [1], [0, 0, 1, 1], [], []>} : vector<8x32xf32>, vector<32x64xf32>, vector<8x64xf32> -> vector<8x64xf32>
    %c0_24 = arith.constant 0 : index
    %c0_25 = arith.constant 0 : index
    %c0_26 = arith.constant 0 : index
    %55 = vector.load %arg7[%c0_24, %c0_25, %c0_26] : memref<1x8x1xf32, #tpu.memory_space<vmem>>, vector<1x8x1xf32>
    %56 = vector.shape_cast %55 : vector<1x8x1xf32> to vector<8x1xf32>
    %57 = vector.broadcast %56 : vector<8x1xf32> to vector<8x64xf32>
    %58 = arith.addf %54, %57 : vector<8x64xf32>
    %59 = vector.extract_strided_slice %58 {offsets = [0, 0], sizes = [8, 32], strides = [1, 1]} : vector<8x64xf32> to vector<8x32xf32>
    %60 = vector.extract_strided_slice %58 {offsets = [0, 32], sizes = [8, 32], strides = [1, 1]} : vector<8x64xf32> to vector<8x32xf32>
    %61 = vector.shape_cast %59 : vector<8x32xf32> to vector<1x8x32xf32>
    %62 = vector.shape_cast %60 : vector<8x32xf32> to vector<1x8x32xf32>
    %63 = tpu.concatenate %61, %62 in 0 : vector<1x8x32xf32>, vector<1x8x32xf32> -> vector<2x8x32xf32>
    %64 = arith.addf %3, %63 : vector<2x8x32xf32>
    %65 = vector.extract_strided_slice %5 {offsets = [2, 0], sizes = [1, 32], strides = [1, 1]} : vector<4x32xf32> to vector<1x32xf32>
    %66 = vector.extract_strided_slice %5 {offsets = [3, 0], sizes = [1, 32], strides = [1, 1]} : vector<4x32xf32> to vector<1x32xf32>
    %cst_27 = arith.constant dense<0.000000e+00> : vector<2x8xf32>
    %67 = vector.multi_reduction <add>, %64, %cst_27 [2] : vector<2x8x32xf32> to vector<2x8xf32>
    %68 = vector.shape_cast %67 : vector<2x8xf32> to vector<2x8x1xf32>
    %cst_28 = arith.constant 3.200000e+01 : f32
    %69 = vector.broadcast %cst_28 : f32 to vector<2x8x1xf32>
    %70 = arith.divf %68, %69 : vector<2x8x1xf32>
    %71 = vector.broadcast %70 : vector<2x8x1xf32> to vector<2x8x32xf32>
    %72 = arith.subf %64, %71 : vector<2x8x32xf32>
    %73 = arith.mulf %72, %72 : vector<2x8x32xf32>
    %cst_29 = arith.constant dense<0.000000e+00> : vector<2x8xf32>
    %74 = vector.multi_reduction <add>, %73, %cst_29 [2] : vector<2x8x32xf32> to vector<2x8xf32>
    %75 = vector.shape_cast %74 : vector<2x8xf32> to vector<2x8x1xf32>
    %cst_30 = arith.constant 3.200000e+01 : f32
    %76 = vector.broadcast %cst_30 : f32 to vector<2x8x1xf32>
    %77 = arith.divf %75, %76 : vector<2x8x1xf32>
    %78 = vector.broadcast %70 : vector<2x8x1xf32> to vector<2x8x32xf32>
    %79 = arith.subf %64, %78 : vector<2x8x32xf32>
    %cst_31 = arith.constant 9.99999974E-6 : f32
    %80 = vector.broadcast %cst_31 : f32 to vector<2x8x1xf32>
    %81 = arith.addf %77, %80 : vector<2x8x1xf32>
    %82 = math.rsqrt %81 : vector<2x8x1xf32>
    %83 = vector.broadcast %82 : vector<2x8x1xf32> to vector<2x8x32xf32>
    %84 = arith.mulf %79, %83 : vector<2x8x32xf32>
    %85 = vector.shape_cast %65 : vector<1x32xf32> to vector<1x1x32xf32>
    %86 = vector.broadcast %85 : vector<1x1x32xf32> to vector<2x8x32xf32>
    %87 = arith.mulf %84, %86 : vector<2x8x32xf32>
    %88 = vector.shape_cast %66 : vector<1x32xf32> to vector<1x1x32xf32>
    %89 = vector.broadcast %88 : vector<1x1x32xf32> to vector<2x8x32xf32>
    %90 = arith.addf %87, %89 : vector<2x8x32xf32>
    %91 = vector.shape_cast %90 : vector<2x8x32xf32> to vector<16x32xf32>
    %c0_32 = arith.constant 0 : index
    %c0_33 = arith.constant 0 : index
    %c0_34 = arith.constant 0 : index
    %92 = vector.load %arg8[%c0_32, %c0_33, %c0_34] : memref<1x32x32xf32, #tpu.memory_space<vmem>>, vector<1x32x32xf32>
    %93 = vector.shape_cast %92 : vector<1x32x32xf32> to vector<32x32xf32>
    %c0_35 = arith.constant 0 : index
    %c0_36 = arith.constant 0 : index
    %c0_37 = arith.constant 0 : index
    %94 = vector.load %arg10[%c0_35, %c0_36, %c0_37] : memref<1x32x32xf32, #tpu.memory_space<vmem>>, vector<1x32x32xf32>
    %95 = vector.shape_cast %94 : vector<1x32x32xf32> to vector<32x32xf32>
    %cst_38 = arith.constant dense<0.000000e+00> : vector<16x32xf32>
    %96 = tpu.matmul %91, %93, %cst_38 {dimension_numbers = #tpu.dot_dimension_numbers<[1], [0], [0], [1], [0, 0, 1, 1], [], []>} : vector<16x32xf32>, vector<32x32xf32>, vector<16x32xf32> -> vector<16x32xf32>
    %c0_39 = arith.constant 0 : index
    %c0_40 = arith.constant 0 : index
    %c0_41 = arith.constant 0 : index
    %97 = vector.load %arg9[%c0_39, %c0_40, %c0_41] : memref<1x1x32xf32, #tpu.memory_space<vmem>>, vector<1x1x32xf32>
    %98 = vector.shape_cast %97 : vector<1x1x32xf32> to vector<1x32xf32>
    %99 = vector.broadcast %98 : vector<1x32xf32> to vector<16x32xf32>
    %100 = arith.addf %96, %99 : vector<16x32xf32>
    %cst_42 = arith.constant 5.000000e-01 : f32
    %101 = vector.broadcast %cst_42 : f32 to vector<16x32xf32>
    %102 = arith.mulf %101, %100 : vector<16x32xf32>
    %cst_43 = arith.constant 0.707106769 : f32
    %103 = vector.broadcast %cst_43 : f32 to vector<16x32xf32>
    %104 = arith.mulf %100, %103 : vector<16x32xf32>
    %105 = math.erf %104 : vector<16x32xf32>
    %cst_44 = arith.constant 1.000000e+00 : f32
    %106 = vector.broadcast %cst_44 : f32 to vector<16x32xf32>
    %107 = arith.addf %106, %105 : vector<16x32xf32>
    %108 = arith.mulf %102, %107 : vector<16x32xf32>
    %cst_45 = arith.constant dense<0.000000e+00> : vector<16x32xf32>
    %109 = tpu.matmul %108, %95, %cst_45 {dimension_numbers = #tpu.dot_dimension_numbers<[1], [0], [0], [1], [0, 0, 1, 1], [], []>} : vector<16x32xf32>, vector<32x32xf32>, vector<16x32xf32> -> vector<16x32xf32>
    %c0_46 = arith.constant 0 : index
    %c0_47 = arith.constant 0 : index
    %c0_48 = arith.constant 0 : index
    %110 = vector.load %arg11[%c0_46, %c0_47, %c0_48] : memref<1x1x32xf32, #tpu.memory_space<vmem>>, vector<1x1x32xf32>
    %111 = vector.shape_cast %110 : vector<1x1x32xf32> to vector<1x32xf32>
    %112 = vector.broadcast %111 : vector<1x32xf32> to vector<16x32xf32>
    %113 = arith.addf %109, %112 : vector<16x32xf32>
    %114 = vector.shape_cast %113 : vector<16x32xf32> to vector<2x8x32xf32>
    %115 = arith.addf %64, %114 : vector<2x8x32xf32>
    %c0_49 = arith.constant 0 : index
    %c0_50 = arith.constant 0 : index
    %c0_51 = arith.constant 0 : index
    %116 = vector.load %arg13[%c0_49, %c0_50, %c0_51] : memref<2x8x32xf32, #tpu.memory_space<vmem>>, vector<2x8x32xf32>
    tpu.vector_store %arg13[%c0_49, %c0_50, %c0_51], %115 {strides = array<i32>} : memref<2x8x32xf32, #tpu.memory_space<vmem>>, vector<2x8x32xf32>,
    %c1_i32 = arith.constant 1 : i32
    %117 = arith.cmpi eq, %arg1, %c1_i32 : i32
    %118 = arith.extui %117 : i1 to i32
    %c0_i32_52 = arith.constant 0 : i32
    %119 = arith.cmpi ne, %118, %c0_i32_52 : i32
    scf.if %119 {
      %cst_53 = arith.constant dense<0.000000e+00> : vector<2x32xf32>
      %120 = vector.multi_reduction <add>, %115, %cst_53 [1] : vector<2x8x32xf32> to vector<2x32xf32>
      %cst_54 = arith.constant 8.000000e+00 : f32
      %121 = vector.broadcast %cst_54 : f32 to vector<2x32xf32>
      %122 = arith.divf %120, %121 : vector<2x32xf32>
      %c0_55 = arith.constant 0 : index
      %c0_56 = arith.constant 0 : index
      %123 = vector.load %arg12[%c0_55, %c0_56] : memref<2x32xf32, #tpu.memory_space<vmem>>, vector<2x32xf32>
      tpu.vector_store %arg12[%c0_55, %c0_56], %122 {strides = array<i32>} : memref<2x32xf32, #tpu.memory_space<vmem>>, vector<2x32xf32>,
    } else {
    }
    return
  }
  func.func @transform_0(%arg0: i32, %arg1: i32) -> (i32, i32, i32) {
    %c0_i32 = arith.constant 0 : i32
    %c0_i32_0 = arith.constant 0 : i32
    %c0_i32_1 = arith.constant 0 : i32
    return %arg0, %c0_i32, %c0_i32_0 : i32, i32, i32
  }
  func.func @transform_1(%arg0: i32, %arg1: i32) -> (i32, i32, i32) {
    %c0_i32 = arith.constant 0 : i32
    %c0_i32_0 = arith.constant 0 : i32
    %c0_i32_1 = arith.constant 0 : i32
    return %arg1, %c0_i32, %c0_i32_0 : i32, i32, i32
  }
  func.func @transform_2(%arg0: i32, %arg1: i32) -> (i32, i32, i32) {
    %c0_i32 = arith.constant 0 : i32
    %c0_i32_0 = arith.constant 0 : i32
    %c0_i32_1 = arith.constant 0 : i32
    return %arg1, %c0_i32, %c0_i32_0 : i32, i32, i32
  }
  func.func @transform_3(%arg0: i32, %arg1: i32) -> (i32, i32, i32) {
    %c0_i32 = arith.constant 0 : i32
    %c0_i32_0 = arith.constant 0 : i32
    %c0_i32_1 = arith.constant 0 : i32
    return %arg1, %c0_i32, %c0_i32_0 : i32, i32, i32
  }
  func.func @transform_4(%arg0: i32, %arg1: i32) -> (i32, i32, i32) {
    %c0_i32 = arith.constant 0 : i32
    %c0_i32_0 = arith.constant 0 : i32
    %c0_i32_1 = arith.constant 0 : i32
    return %arg1, %c0_i32, %c0_i32_0 : i32, i32, i32
  }
  func.func @transform_5(%arg0: i32, %arg1: i32) -> (i32, i32, i32) {
    %c0_i32 = arith.constant 0 : i32
    %c0_i32_0 = arith.constant 0 : i32
    %c0_i32_1 = arith.constant 0 : i32
    return %arg1, %c0_i32, %c0_i32_0 : i32, i32, i32
  }
  func.func @transform_6(%arg0: i32, %arg1: i32) -> (i32, i32, i32) {
    %c0_i32 = arith.constant 0 : i32
    %c0_i32_0 = arith.constant 0 : i32
    %c0_i32_1 = arith.constant 0 : i32
    return %arg1, %c0_i32, %c0_i32_0 : i32, i32, i32
  }
  func.func @transform_7(%arg0: i32, %arg1: i32) -> (i32, i32, i32) {
    %c0_i32 = arith.constant 0 : i32
    %c0_i32_0 = arith.constant 0 : i32
    %c0_i32_1 = arith.constant 0 : i32
    return %arg1, %c0_i32, %c0_i32_0 : i32, i32, i32
  }
  func.func @transform_8(%arg0: i32, %arg1: i32) -> (i32, i32, i32) {
    %c0_i32 = arith.constant 0 : i32
    %c0_i32_0 = arith.constant 0 : i32
    %c0_i32_1 = arith.constant 0 : i32
    return %arg1, %c0_i32, %c0_i32_0 : i32, i32, i32
  }
  func.func @transform_9(%arg0: i32, %arg1: i32) -> (i32, i32, i32) {
    %c0_i32 = arith.constant 0 : i32
    %c0_i32_0 = arith.constant 0 : i32
    %c0_i32_1 = arith.constant 0 : i32
    return %arg1, %c0_i32, %c0_i32_0 : i32, i32, i32
  }
  func.func @transform_10(%arg0: i32, %arg1: i32) -> (i32, i32) {
    %c0_i32 = arith.constant 0 : i32
    %c0_i32_0 = arith.constant 0 : i32
    return %arg0, %c0_i32 : i32, i32
  }
}

</mosaic_0001>

<llo_original>
// kernel: tpu_custom_call.1
$region0: #{tpu_custom_call.1}
  #allocation0 [shape = 'u32[]', space=smem, size = 0x4, offset = 0x4, fixed_abs, tag = 'smem constant byte address 0x4 - core index']
  #allocation1 [shape = 'u32[72,128]{1,0:T(1,128)}', space=vmem, size = 0x9000, scoped, tag = 'internal scratch']
  #allocation2 [shape = 'f32[2,8,32]{2,1,0:T(8,128)}', space=vmem, size = 0x2000, scoped, tag = 'scratch operand']
  %s0 = inlined_call_operand.vmem [shape: f32[2,8,32], index: 0, kind: input, shape index: {}]
  %s1 = inlined_call_operand.hbm [shape: f32[2,4,32], index: 1, kind: input, shape index: {}]
  %s2 = inlined_call_operand.vmem [shape: f32[2,32,8], index: 2, kind: input, shape index: {}]
  %s3 = inlined_call_operand.vmem [shape: f32[2,32,1], index: 3, kind: input, shape index: {}]
  %s4 = inlined_call_operand.hbm [shape: f32[2,8,32], index: 4, kind: input, shape index: {}]
  %s5 = inlined_call_operand.vmem [shape: f32[2,8,1], index: 5, kind: input, shape index: {}]
  %s6 = inlined_call_operand.vmem [shape: f32[2,32,32], index: 6, kind: input, shape index: {}]
  %s7 = inlined_call_operand.vmem [shape: f32[2,1,32], index: 7, kind: input, shape index: {}]
  %s8 = inlined_call_operand.vmem [shape: f32[2,32,32], index: 8, kind: input, shape index: {}]
  %s9 = inlined_call_operand.vmem [shape: f32[2,1,32], index: 9, kind: input, shape index: {}]
  %s10 = inlined_call_operand.hbm [shape: f32[2,32], index: 10, kind: output, shape index: {}]
  %s11 = sld [smem:[#allocation0]]
  $region89: #{tpu_custom_call.1} parent=0
    _
  %s13 = ssub.s32 1, %s11
  %s14 = scalar_select 0, %s13, %s11
  $region1: #{tpu_custom_call.1} parent=0
    #allocation3 [shape = 'u8[4096]{0}', space=vmem, size = 0x1000, scoped, tag = 'input window, operand 1']
    #allocation4 [shape = 's32[2]{0}', space=sflag, size = 0x8, scoped, tag = 'scoped memory for tpu_custom_call.1']
    #allocation5 [shape = 's32[2]{0}', space=sflag, size = 0x8, scoped, tag = 'scoped memory for tpu_custom_call.1']
    #allocation6 [shape = 'u8[8192]{0}', space=vmem, size = 0x2000, scoped, tag = 'input window, operand 4']
    #allocation7 [shape = 's32[2]{0}', space=sflag, size = 0x8, scoped, tag = 'scoped memory for tpu_custom_call.1']
    #allocation8 [shape = 'u8[1024]{0}', space=vmem, size = 0x400, scoped, tag = 'output window, operand 0, single buffered']
    %15 = vsyncpa [#allocation4], 0
    %s16 = scalar_lea.sflag [#allocation4], 1
    %17 = vsyncpa %s16, 0
    %18 = vsyncpa [#allocation7], 0
    %s19 = scalar_lea.sflag [#allocation7], 1
    %20 = vsyncpa %s19, 0
    %21 = vsyncpa [#allocation5], 0
    loop: start=0, step=1, limit=4
    $region2: #{tpu_custom_call.1} parent=1 // loop_pre_header
      _
    $region3: #{tpu_custom_call.1} parent=1 // loop_header
      %s23 = sphi 0, %s27
      %p24 = scmp.ge.s32.totalorder %s23, 4
      %s30 = sphi 0, %s42
      %s31 = sphi 0, %s38
      %s32 = sphi 0, %s30
      %s33 = sphi 0, %s31
      %s34 = sphi 0, %s32
      %s35 = sphi 0, %s33
      %s45 = sphi 0, %s47
      %s48 = sphi 0, %s45
      %s49 = sphi 0, %s48
      %s65 = sphi 0, %s49
      %s71 = sphi 0, %s73
      %s74 = sphi 0, %s71
      %s75 = sphi 0, %s74
      %s91 = sphi 0, %s75
      %s97 = sphi 0, %s99
      %s100 = sphi 0, %s97
      %s101 = sphi 0, %s100
      %s117 = sphi 0, %s101
      %s123 = sphi 0, %s125
      %s126 = sphi 0, %s123
      %s127 = sphi 0, %s126
      %s143 = sphi 0, %s127
      %s149 = sphi 0, %s151
      %s152 = sphi 0, %s149
      %s153 = sphi 0, %s152
      %s169 = sphi 0, %s153
      %s175 = sphi 0, %s177
      %s178 = sphi 0, %s175
      %s179 = sphi 0, %s178
      %s195 = sphi 0, %s179
      %s201 = sphi 0, %s203
      %s204 = sphi 0, %s201
      %s205 = sphi 0, %s204
      %s221 = sphi 0, %s205
      %s227 = sphi 0, %s229
      %s230 = sphi 0, %s227
      %s231 = sphi 0, %s230
      %s247 = sphi 0, %s231
      %s253 = sphi 0, %s255
      %s256 = sphi 0, %s253
      %s257 = sphi 0, %s256
      %s273 = sphi 0, %s257
      %s279 = sphi 0, %s281
      %s282 = sphi 0, %s279
      %s283 = sphi 0, %s282
      %s299 = sphi 0, %s283
      %s305 = sphi 0, %s307
      %s308 = sphi 0, %s305
      %s309 = sphi 0, %s308
      %s325 = sphi 0, %s309
    $region4: #{tpu_custom_call.1} parent=1 // loop_header_branch
      %26 = sbr.rel (%p24) target = $region8
    $region5: #{tpu_custom_call.1} parent=1 // loop_body
      %s28 = ssub.s32 %s23, 1
      %s29 = ssub.s32 %s23, 2
      %s36 = sadd.s32 1, %s31
      %p37 = scmp.ge.s32.totalorder %s36, 2
      %s38 = scalar_select %p37, 0, %s36
      %s39 = sadd.s32 1, %s30
      %s40 = scalar_select %p37, %s39, %s30
      %p41 = scmp.ge.s32.totalorder %s40, 1
      %s42 = scalar_select %p41, 0, %s40
      %s43 = ssub.s32 %s30, %s42
      %p44 = scmp.eq.s32.totalorder %s43, 0
      %s46 = sadd.s32 %s45, 1
      %s47 = scalar_select %p44, %s45, %s46
      %p50 = pneg %p44
      %p51 = scmp.eq.s32.totalorder %s23, 1
      %p52 = por %p50, %p51
      %p53 = scmp.ne.s32.totalorder %s45, %s48
      %p54 = scmp.eq.s32.totalorder %s23, 0
      %p55 = por %p53, %p54
      %p56 = scmp.ne.s32.totalorder %s45, %s48
      %p57 = scmp.eq.s32.totalorder %s28, 1
      %p58 = por %p56, %p57
      %p59 = scmp.ne.s32.totalorder %s48, %s49
      %p60 = scmp.eq.s32.totalorder %s28, 0
      %p61 = por %p59, %p60
      %p62 = scmp.ne.s32.totalorder %s48, %s49
      %p63 = scmp.eq.s32.totalorder %s29, 1
      %p64 = por %p62, %p63
      %p66 = scmp.ne.s32.totalorder %s49, %s65
      %p67 = scmp.eq.s32.totalorder %s29, 0
      %p68 = por %p66, %p67
      %s69 = ssub.s32 %s31, %s38
      %p70 = scmp.eq.s32.totalorder %s69, 0
      %s72 = sadd.s32 %s71, 1
      %s73 = scalar_select %p70, %s71, %s72
      %p76 = pneg %p70
      %p77 = scmp.eq.s32.totalorder %s23, 1
      %p78 = por %p76, %p77
      %p79 = scmp.ne.s32.totalorder %s71, %s74
      %p80 = scmp.eq.s32.totalorder %s23, 0
      %p81 = por %p79, %p80
      %p82 = scmp.ne.s32.totalorder %s71, %s74
      %p83 = scmp.eq.s32.totalorder %s28, 1
      %p84 = por %p82, %p83
      %p85 = scmp.ne.s32.totalorder %s74, %s75
      %p86 = scmp.eq.s32.totalorder %s28, 0
      %p87 = por %p85, %p86
      %p88 = scmp.ne.s32.totalorder %s74, %s75
      %p89 = scmp.eq.s32.totalorder %s29, 1
      %p90 = por %p88, %p89
      %p92 = scmp.ne.s32.totalorder %s75, %s91
      %p93 = scmp.eq.s32.totalorder %s29, 0
      %p94 = por %p92, %p93
      %s95 = ssub.s32 %s31, %s38
      %p96 = scmp.eq.s32.totalorder %s95, 0
      %s98 = sadd.s32 %s97, 1
      %s99 = scalar_select %p96, %s97, %s98
      %p102 = pneg %p96
      %p103 = scmp.eq.s32.totalorder %s23, 1
      %p104 = por %p102, %p103
      %p105 = scmp.ne.s32.totalorder %s97, %s100
      %p106 = scmp.eq.s32.totalorder %s23, 0
      %p107 = por %p105, %p106
      %p108 = scmp.ne.s32.totalorder %s97, %s100
      %p109 = scmp.eq.s32.totalorder %s28, 1
      %p110 = por %p108, %p109
      %p111 = scmp.ne.s32.totalorder %s100, %s101
      %p112 = scmp.eq.s32.totalorder %s28, 0
      %p113 = por %p111, %p112
      %p114 = scmp.ne.s32.totalorder %s100, %s101
      %p115 = scmp.eq.s32.totalorder %s29, 1
      %p116 = por %p114, %p115
      %p118 = scmp.ne.s32.totalorder %s101, %s117
      %p119 = scmp.eq.s32.totalorder %s29, 0
      %p120 = por %p118, %p119
      %s121 = ssub.s32 %s31, %s38
      %p122 = scmp.eq.s32.totalorder %s121, 0
      %s124 = sadd.s32 %s123, 1
      %s125 = scalar_select %p122, %s123, %s124
      %p128 = pneg %p122
      %p129 = scmp.eq.s32.totalorder %s23, 1
      %p130 = por %p128, %p129
      %p131 = scmp.ne.s32.totalorder %s123, %s126
      %p132 = scmp.eq.s32.totalorder %s23, 0
      %p133 = por %p131, %p132
      %p134 = scmp.ne.s32.totalorder %s123, %s126
      %p135 = scmp.eq.s32.totalorder %s28, 1
      %p136 = por %p134, %p135
      %p137 = scmp.ne.s32.totalorder %s126, %s127
      %p138 = scmp.eq.s32.totalorder %s28, 0
      %p139 = por %p137, %p138
      %p140 = scmp.ne.s32.totalorder %s126, %s127
      %p141 = scmp.eq.s32.totalorder %s29, 1
      %p142 = por %p140, %p141
      %p144 = scmp.ne.s32.totalorder %s127, %s143
      %p145 = scmp.eq.s32.totalorder %s29, 0
      %p146 = por %p144, %p145
      %s147 = ssub.s32 %s31, %s38
      %p148 = scmp.eq.s32.totalorder %s147, 0
      %s150 = sadd.s32 %s149, 1
      %s151 = scalar_select %p148, %s149, %s150
      %p154 = pneg %p148
      %p155 = scmp.eq.s32.totalorder %s23, 1
      %p156 = por %p154, %p155
      %p157 = scmp.ne.s32.totalorder %s149, %s152
      %p158 = scmp.eq.s32.totalorder %s23, 0
      %p159 = por %p157, %p158
      %p160 = scmp.ne.s32.totalorder %s149, %s152
      %p161 = scmp.eq.s32.totalorder %s28, 1
      %p162 = por %p160, %p161
      %p163 = scmp.ne.s32.totalorder %s152, %s153
      %p164 = scmp.eq.s32.totalorder %s28, 0
      %p165 = por %p163, %p164
      %p166 = scmp.ne.s32.totalorder %s152, %s153
      %p167 = scmp.eq.s32.totalorder %s29, 1
      %p168 = por %p166, %p167
      %p170 = scmp.ne.s32.totalorder %s153, %s169
      %p171 = scmp.eq.s32.totalorder %s29, 0
      %p172 = por %p170, %p171
      %s173 = ssub.s32 %s31, %s38
      %p174 = scmp.eq.s32.totalorder %s173, 0
      %s176 = sadd.s32 %s175, 1
      %s177 = scalar_select %p174, %s175, %s176
      %p180 = pneg %p174
      %p181 = scmp.eq.s32.totalorder %s23, 1
      %p182 = por %p180, %p181
      %p183 = scmp.ne.s32.totalorder %s175, %s178
      %p184 = scmp.eq.s32.totalorder %s23, 0
      %p185 = por %p183, %p184
      %p186 = scmp.ne.s32.totalorder %s175, %s178
      %p187 = scmp.eq.s32.totalorder %s28, 1
      %p188 = por %p186, %p187
      %p189 = scmp.ne.s32.totalorder %s178, %s179
      %p190 = scmp.eq.s32.totalorder %s28, 0
      %p191 = por %p189, %p190
      %p192 = scmp.ne.s32.totalorder %s178, %s179
      %p193 = scmp.eq.s32.totalorder %s29, 1
      %p194 = por %p192, %p193
      %p196 = scmp.ne.s32.totalorder %s179, %s195
      %p197 = scmp.eq.s32.totalorder %s29, 0
      %p198 = por %p196, %p197
      %s199 = ssub.s32 %s31, %s38
      %p200 = scmp.eq.s32.totalorder %s199, 0
      %s202 = sadd.s32 %s201, 1
      %s203 = scalar_select %p200, %s201, %s202
      %p206 = pneg %p200
      %p207 = scmp.eq.s32.totalorder %s23, 1
      %p208 = por %p206, %p207
      %p209 = scmp.ne.s32.totalorder %s201, %s204
      %p210 = scmp.eq.s32.totalorder %s23, 0
      %p211 = por %p209, %p210
      %p212 = scmp.ne.s32.totalorder %s201, %s204
      %p213 = scmp.eq.s32.totalorder %s28, 1
      %p214 = por %p212, %p213
      %p215 = scmp.ne.s32.totalorder %s204, %s205
      %p216 = scmp.eq.s32.totalorder %s28, 0
      %p217 = por %p215, %p216
      %p218 = scmp.ne.s32.totalorder %s204, %s205
      %p219 = scmp.eq.s32.totalorder %s29, 1
      %p220 = por %p218, %p219
      %p222 = scmp.ne.s32.totalorder %s205, %s221
      %p223 = scmp.eq.s32.totalorder %s29, 0
      %p224 = por %p222, %p223
      %s225 = ssub.s32 %s31, %s38
      %p226 = scmp.eq.s32.totalorder %s225, 0
      %s228 = sadd.s32 %s227, 1
      %s229 = scalar_select %p226, %s227, %s228
      %p232 = pneg %p226
      %p233 = scmp.eq.s32.totalorder %s23, 1
      %p234 = por %p232, %p233
      %p235 = scmp.ne.s32.totalorder %s227, %s230
      %p236 = scmp.eq.s32.totalorder %s23, 0
      %p237 = por %p235, %p236
      %p238 = scmp.ne.s32.totalorder %s227, %s230
      %p239 = scmp.eq.s32.totalorder %s28, 1
      %p240 = por %p238, %p239
      %p241 = scmp.ne.s32.totalorder %s230, %s231
      %p242 = scmp.eq.s32.totalorder %s28, 0
      %p243 = por %p241, %p242
      %p244 = scmp.ne.s32.totalorder %s230, %s231
      %p245 = scmp.eq.s32.totalorder %s29, 1
      %p246 = por %p244, %p245
      %p248 = scmp.ne.s32.totalorder %s231, %s247
      %p249 = scmp.eq.s32.totalorder %s29, 0
      %p250 = por %p248, %p249
      %s251 = ssub.s32 %s31, %s38
      %p252 = scmp.eq.s32.totalorder %s251, 0
      %s254 = sadd.s32 %s253, 1
      %s255 = scalar_select %p252, %s253, %s254
      %p258 = pneg %p252
      %p259 = scmp.eq.s32.totalorder %s23, 1
      %p260 = por %p258, %p259
      %p261 = scmp.ne.s32.totalorder %s253, %s256
      %p262 = scmp.eq.s32.totalorder %s23, 0
      %p263 = por %p261, %p262
      %p264 = scmp.ne.s32.totalorder %s253, %s256
      %p265 = scmp.eq.s32.totalorder %s28, 1
      %p266 = por %p264, %p265
      %p267 = scmp.ne.s32.totalorder %s256, %s257
      %p268 = scmp.eq.s32.totalorder %s28, 0
      %p269 = por %p267, %p268
      %p270 = scmp.ne.s32.totalorder %s256, %s257
      %p271 = scmp.eq.s32.totalorder %s29, 1
      %p272 = por %p270, %p271
      %p274 = scmp.ne.s32.totalorder %s257, %s273
      %p275 = scmp.eq.s32.totalorder %s29, 0
      %p276 = por %p274, %p275
      %s277 = ssub.s32 %s31, %s38
      %p278 = scmp.eq.s32.totalorder %s277, 0
      %s280 = sadd.s32 %s279, 1
      %s281 = scalar_select %p278, %s279, %s280
      %p284 = pneg %p278
      %p285 = scmp.eq.s32.totalorder %s23, 1
      %p286 = por %p284, %p285
      %p287 = scmp.ne.s32.totalorder %s279, %s282
      %p288 = scmp.eq.s32.totalorder %s23, 0
      %p289 = por %p287, %p288
      %p290 = scmp.ne.s32.totalorder %s279, %s282
      %p291 = scmp.eq.s32.totalorder %s28, 1
      %p292 = por %p290, %p291
      %p293 = scmp.ne.s32.totalorder %s282, %s283
      %p294 = scmp.eq.s32.totalorder %s28, 0
      %p295 = por %p293, %p294
      %p296 = scmp.ne.s32.totalorder %s282, %s283
      %p297 = scmp.eq.s32.totalorder %s29, 1
      %p298 = por %p296, %p297
      %p300 = scmp.ne.s32.totalorder %s283, %s299
      %p301 = scmp.eq.s32.totalorder %s29, 0
      %p302 = por %p300, %p301
      %s303 = ssub.s32 %s30, %s42
      %p304 = scmp.eq.s32.totalorder %s303, 0
      %s306 = sadd.s32 %s305, 1
      %s307 = scalar_select %p304, %s305, %s306
      %p310 = pneg %p304
      %p311 = scmp.eq.s32.totalorder %s23, 1
      %p312 = por %p310, %p311
      %p313 = scmp.ne.s32.totalorder %s305, %s308
      %p314 = scmp.eq.s32.totalorder %s23, 0
      %p315 = por %p313, %p314
      %p316 = scmp.ne.s32.totalorder %s305, %s308
      %p317 = scmp.eq.s32.totalorder %s28, 1
      %p318 = por %p316, %p317
      %p319 = scmp.ne.s32.totalorder %s308, %s309
      %p320 = scmp.eq.s32.totalorder %s28, 0
      %p321 = por %p319, %p320
      %p322 = scmp.ne.s32.totalorder %s308, %s309
      %p323 = scmp.eq.s32.totalorder %s29, 1
      %p324 = por %p322, %p323
      %p326 = scmp.ne.s32.totalorder %s309, %s325
      %p327 = scmp.eq.s32.totalorder %s29, 0
      %p328 = por %p326, %p327
      %p329 = scmp.le.s32.totalorder 1, %s23
      %p330 = scmp.lt.s32.totalorder %s23, 3
      %p331 = pnand %p329, %p330
      %p332 = pneg %p331
      // Predicated region
      $region9: #{tpu_custom_call.1} parent=5 // pred_check
        _
      $region10: #{tpu_custom_call.1} parent=5 // pred_check_branch
        %334 = sbr.rel (%p331) target = $region12
      $region11: #{tpu_custom_call.1} parent=5 // pred_region
        %s335 = ssub.s32 %s23, 1
        // Predicated region
        $region13: #{tpu_custom_call.1} parent=11 // pred_check
          %p336 = pneg %p61
        $region14: #{tpu_custom_call.1} parent=11 // pred_check_branch
          %338 = sbr.rel (%p336) target = $region16
        $region15: #{tpu_custom_call.1} parent=11 // pred_region
          %s339 = smul.u32 2, %s32
          %p340 = scmp.lt.s32.totalorder %s339, 1
          %s341 = scalar_select %p340, %s339, 1
          %s342 = smul.addr %s341, 8
          %s343 = scalar_lea.vmem %s0, %s342
          %s344 = smul.u32 2, %s32
        $region16: #{tpu_custom_call.1} parent=11 // pred_fallthru
          _
      $region12: #{tpu_custom_call.1} parent=5 // pred_fallthru
        _
      %p345 = scmp.lt.s32.totalorder %s23, 2
      // Predicated region
      $region17: #{tpu_custom_call.1} parent=5 // pred_check
        %p346 = pneg %p345
      $region18: #{tpu_custom_call.1} parent=5 // pred_check_branch
        %348 = sbr.rel (%p346) target = $region20
      $region19: #{tpu_custom_call.1} parent=5 // pred_region
        // Predicated region
        $region21: #{tpu_custom_call.1} parent=19 // pred_check
          %p349 = pneg %p81
        $region22: #{tpu_custom_call.1} parent=19 // pred_check_branch
          %351 = sbr.rel (%p349) target = $region24
        $region23: #{tpu_custom_call.1} parent=19 // pred_region
          %s352 = sand.u32 %s71, 1
          %s353 = scalar_lea.sflag [#allocation4], %s352
          %s354 = sand.u32 %s71, 1
          %s355 = smul.addr %s354, 4
          %s356 = scalar_lea.vmem [#allocation3], %s355
          %358 = vsyncadd %s353, 0
          %s359 = smul.addr %s31, 4
          %s360 = scalar_lea.hbm %s1, %s359
          %s362 = sshll.u32 %s360, 4
          %s363 = int_to_ptr.hbm [resolvable:$true] %s362
          %s364 = sshll.u32 %s356, 4
          %s365 = int_to_ptr.vmem [resolvable:$true] %s364
          %367 = dma.hbm_to_vmem [thread:$0]  %s363, 64, %s365, %s353
        $region24: #{tpu_custom_call.1} parent=19 // pred_fallthru
          _
        // Predicated region
        $region25: #{tpu_custom_call.1} parent=19 // pred_check
          %p368 = pneg %p107
        $region26: #{tpu_custom_call.1} parent=19 // pred_check_branch
          %370 = sbr.rel (%p368) target = $region28
        $region27: #{tpu_custom_call.1} parent=19 // pred_region
          %p371 = scmp.lt.s32.totalorder %s31, 1
          %s372 = scalar_select %p371, %s31, 1
          %s373 = smul.addr %s372, 4
          %s374 = smul.addr %s373, 8
          %s375 = scalar_lea.vmem %s2, %s374
        $region28: #{tpu_custom_call.1} parent=19 // pred_fallthru
          _
        // Predicated region
        $region29: #{tpu_custom_call.1} parent=19 // pred_check
          %p376 = pneg %p133
        $region30: #{tpu_custom_call.1} parent=19 // pred_check_branch
          %378 = sbr.rel (%p376) target = $region32
        $region31: #{tpu_custom_call.1} parent=19 // pred_region
          %p379 = scmp.lt.s32.totalorder %s31, 1
          %s380 = scalar_select %p379, %s31, 1
          %s381 = smul.addr %s380, 4
          %s382 = smul.addr %s381, 8
          %s383 = scalar_lea.vmem %s3, %s382
        $region32: #{tpu_custom_call.1} parent=19 // pred_fallthru
          _
        // Predicated region
        $region33: #{tpu_custom_call.1} parent=19 // pred_check
          %p384 = pneg %p159
        $region34: #{tpu_custom_call.1} parent=19 // pred_check_branch
          %386 = sbr.rel (%p384) target = $region36
        $region35: #{tpu_custom_call.1} parent=19 // pred_region
          %s387 = sand.u32 %s149, 1
          %s388 = scalar_lea.sflag [#allocation7], %s387
          %s389 = sand.u32 %s149, 1
          %s390 = smul.addr %s389, 8
          %s391 = scalar_lea.vmem [#allocation6], %s390
          %393 = vsyncadd %s388, 0
          %s394 = smul.addr %s31, 8
          %s395 = scalar_lea.hbm %s4, %s394
          %s397 = sshll.u32 %s395, 4
          %s398 = int_to_ptr.hbm [resolvable:$true] %s397
          %s399 = sshll.u32 %s391, 4
          %s400 = int_to_ptr.vmem [resolvable:$true] %s399
          %402 = dma.hbm_to_vmem [thread:$0]  %s398, 128, %s400, %s388
        $region36: #{tpu_custom_call.1} parent=19 // pred_fallthru
          _
        // Predicated region
        $region37: #{tpu_custom_call.1} parent=19 // pred_check
          %p403 = pneg %p185
        $region38: #{tpu_custom_call.1} parent=19 // pred_check_branch
          %405 = sbr.rel (%p403) target = $region40
        $region39: #{tpu_custom_call.1} parent=19 // pred_region
          %p406 = scmp.lt.s32.totalorder %s31, 1
          %s407 = scalar_select %p406, %s31, 1
          %s408 = smul.addr %s407, 8
          %s409 = scalar_lea.vmem %s5, %s408
        $region40: #{tpu_custom_call.1} parent=19 // pred_fallthru
          _
        // Predicated region
        $region41: #{tpu_custom_call.1} parent=19 // pred_check
          %p410 = pneg %p211
        $region42: #{tpu_custom_call.1} parent=19 // pred_check_branch
          %412 = sbr.rel (%p410) target = $region44
        $region43: #{tpu_custom_call.1} parent=19 // pred_region
          %p413 = scmp.lt.s32.totalorder %s31, 1
          %s414 = scalar_select %p413, %s31, 1
          %s415 = smul.addr %s414, 4
          %s416 = smul.addr %s415, 8
          %s417 = scalar_lea.vmem %s6, %s416
        $region44: #{tpu_custom_call.1} parent=19 // pred_fallthru
          _
        // Predicated region
        $region45: #{tpu_custom_call.1} parent=19 // pred_check
          %p418 = pneg %p237
        $region46: #{tpu_custom_call.1} parent=19 // pred_check_branch
          %420 = sbr.rel (%p418) target = $region48
        $region47: #{tpu_custom_call.1} parent=19 // pred_region
          %p421 = scmp.lt.s32.totalorder %s31, 1
          %s422 = scalar_select %p421, %s31, 1
          %s423 = scalar_lea.vmem %s7, %s422
        $region48: #{tpu_custom_call.1} parent=19 // pred_fallthru
          _
        // Predicated region
        $region49: #{tpu_custom_call.1} parent=19 // pred_check
          %p424 = pneg %p263
        $region50: #{tpu_custom_call.1} parent=19 // pred_check_branch
          %426 = sbr.rel (%p424) target = $region52
        $region51: #{tpu_custom_call.1} parent=19 // pred_region
          %p427 = scmp.lt.s32.totalorder %s31, 1
          %s428 = scalar_select %p427, %s31, 1
          %s429 = smul.addr %s428, 4
          %s430 = smul.addr %s429, 8
          %s431 = scalar_lea.vmem %s8, %s430
        $region52: #{tpu_custom_call.1} parent=19 // pred_fallthru
          _
        // Predicated region
        $region53: #{tpu_custom_call.1} parent=19 // pred_check
          %p432 = pneg %p289
        $region54: #{tpu_custom_call.1} parent=19 // pred_check_branch
          %434 = sbr.rel (%p432) target = $region56
        $region55: #{tpu_custom_call.1} parent=19 // pred_region
          %p435 = scmp.lt.s32.totalorder %s31, 1
          %s436 = scalar_select %p435, %s31, 1
          %s437 = scalar_lea.vmem %s9, %s436
        $region56: #{tpu_custom_call.1} parent=19 // pred_fallthru
          _
      $region20: #{tpu_custom_call.1} parent=5 // pred_fallthru
        _
      %p438 = scmp.le.s32.totalorder 1, %s23
      %p439 = scmp.lt.s32.totalorder %s23, 3
      %p440 = pnand %p438, %p439
      %p441 = pneg %p440
      // Predicated region
      $region57: #{tpu_custom_call.1} parent=5 // pred_check
        _
      $region58: #{tpu_custom_call.1} parent=5 // pred_check_branch
        %443 = sbr.rel (%p440) target = $region60
      $region59: #{tpu_custom_call.1} parent=5 // pred_region
        %s444 = ssub.s32 %s23, 1
        %s445 = sand.u32 %s74, 1
        %s446 = scalar_lea.sflag [#allocation4], %s445
        %s447 = sand.u32 %s74, 1
        %s448 = smul.addr %s447, 4
        %s449 = scalar_lea.vmem [#allocation3], %s448
        // Predicated region
        $region61: #{tpu_custom_call.1} parent=59 // pred_check
          %p450 = pneg %p87
        $region62: #{tpu_custom_call.1} parent=59 // pred_check_branch
          %452 = sbr.rel (%p450) target = $region64
        $region63: #{tpu_custom_call.1} parent=59 // pred_region
          %454 = dma.done %s446, 64
        $region64: #{tpu_custom_call.1} parent=59 // pred_fallthru
          _
        %s455 = sand.u32 %s152, 1
        %s456 = scalar_lea.sflag [#allocation7], %s455
        %s457 = sand.u32 %s152, 1
        %s458 = smul.addr %s457, 8
        %s459 = scalar_lea.vmem [#allocation6], %s458
        // Predicated region
        $region65: #{tpu_custom_call.1} parent=59 // pred_check
          %p460 = pneg %p165
        $region66: #{tpu_custom_call.1} parent=59 // pred_check_branch
          %462 = sbr.rel (%p460) target = $region68
        $region67: #{tpu_custom_call.1} parent=59 // pred_region
          %464 = dma.done %s456, 128
        $region68: #{tpu_custom_call.1} parent=59 // pred_fallthru
          _
        %s465 = smul.u32 2, %s32
        %p466 = scmp.lt.s32.totalorder %s465, 1
        %s467 = scalar_select %p466, %s465, 1
        %s468 = smul.addr %s467, 8
        %s469 = scalar_lea.vmem %s0, %s468
        %p470 = pneg %p61
        %p471 = pneg %p58
        %s472 = sand.u32 %s74, 1
        %s473 = scalar_lea.sflag [#allocation4], %s472
        %s474 = sand.u32 %s74, 1
        %s475 = smul.addr %s474, 4
        %s476 = scalar_lea.vmem [#allocation3], %s475
        %p477 = pneg %p87
        %p478 = pneg %p84
        %p479 = scmp.lt.s32.totalorder %s33, 1
        %s480 = scalar_select %p479, %s33, 1
        %s481 = smul.addr %s480, 4
        %s482 = smul.addr %s481, 8
        %s483 = scalar_lea.vmem %s2, %s482
        %p484 = pneg %p113
        %p485 = pneg %p110
        %p486 = scmp.lt.s32.totalorder %s33, 1
        %s487 = scalar_select %p486, %s33, 1
        %s488 = smul.addr %s487, 4
        %s489 = smul.addr %s488, 8
        %s490 = scalar_lea.vmem %s3, %s489
        %p491 = pneg %p139
        %p492 = pneg %p136
        %s493 = sand.u32 %s152, 1
        %s494 = scalar_lea.sflag [#allocation7], %s493
        %s495 = sand.u32 %s152, 1
        %s496 = smul.addr %s495, 8
        %s497 = scalar_lea.vmem [#allocation6], %s496
        %p498 = pneg %p165
        %p499 = pneg %p162
        %p500 = scmp.lt.s32.totalorder %s33, 1
        %s501 = scalar_select %p500, %s33, 1
        %s502 = smul.addr %s501, 8
        %s503 = scalar_lea.vmem %s5, %s502
        %p504 = pneg %p191
        %p505 = pneg %p188
        %p506 = scmp.lt.s32.totalorder %s33, 1
        %s507 = scalar_select %p506, %s33, 1
        %s508 = smul.addr %s507, 4
        %s509 = smul.addr %s508, 8
        %s510 = scalar_lea.vmem %s6, %s509
        %p511 = pneg %p217
        %p512 = pneg %p214
        %p513 = scmp.lt.s32.totalorder %s33, 1
        %s514 = scalar_select %p513, %s33, 1
        %s515 = scalar_lea.vmem %s7, %s514
        %p516 = pneg %p243
        %p517 = pneg %p240
        %p518 = scmp.lt.s32.totalorder %s33, 1
        %s519 = scalar_select %p518, %s33, 1
        %s520 = smul.addr %s519, 4
        %s521 = smul.addr %s520, 8
        %s522 = scalar_lea.vmem %s8, %s521
        %p523 = pneg %p269
        %p524 = pneg %p266
        %p525 = scmp.lt.s32.totalorder %s33, 1
        %s526 = scalar_select %p525, %s33, 1
        %s527 = scalar_lea.vmem %s9, %s526
        %p528 = pneg %p295
        %p529 = pneg %p292
        %p530 = pneg %p321
        %p531 = pneg %p318
        %s532 = smul.u32 2, %s32
        %p533 = scmp.lt.s32.totalorder %s532, 1
        %s534 = scalar_select %p533, %s532, 1
        %s535 = smul.addr %s534, 8
        %s536 = scalar_lea.vmem %s0, %s535
        %s537 = smul.u32 2, %s32
        %p538 = scmp.lt.s32.totalorder %s33, 1
        %s539 = scalar_select %p538, %s33, 1
        %s540 = smul.addr %s539, 4
        %s541 = smul.addr %s540, 8
        %s542 = scalar_lea.vmem %s2, %s541
        %p543 = scmp.lt.s32.totalorder %s33, 1
        %s544 = scalar_select %p543, %s33, 1
        %s545 = smul.addr %s544, 4
        %s546 = smul.addr %s545, 8
        %s547 = scalar_lea.vmem %s3, %s546
        %p548 = scmp.lt.s32.totalorder %s33, 1
        %s549 = scalar_select %p548, %s33, 1
        %s550 = smul.addr %s549, 8
        %s551 = scalar_lea.vmem %s5, %s550
        %p552 = scmp.lt.s32.totalorder %s33, 1
        %s553 = scalar_select %p552, %s33, 1
        %s554 = smul.addr %s553, 4
        %s555 = smul.addr %s554, 8
        %s556 = scalar_lea.vmem %s6, %s555
        %p557 = scmp.lt.s32.totalorder %s33, 1
        %s558 = scalar_select %p557, %s33, 1
        %s559 = scalar_lea.vmem %s7, %s558
        %p560 = scmp.lt.s32.totalorder %s33, 1
        %s561 = scalar_select %p560, %s33, 1
        %s562 = smul.addr %s561, 4
        %s563 = smul.addr %s562, 8
        %s564 = scalar_lea.vmem %s8, %s563
        %p565 = scmp.lt.s32.totalorder %s33, 1
        %s566 = scalar_select %p565, %s33, 1
        %s567 = scalar_lea.vmem %s9, %s566
        %p568 = scmp.eq.s32.totalorder %s33, 0
        // Predicated region
        $region69: #{tpu_custom_call.1} parent=59 // pred_check
          %p569 = pneg %p568
        $region70: #{tpu_custom_call.1} parent=59 // pred_check_branch
          %571 = sbr.rel (%p569) target = $region72
        $region71: #{tpu_custom_call.1} parent=59 // pred_region
          %v572 = vld [vmem:[%s536] sm:$0xff]
          %v573 = vld [vmem:[%s536 + $0x8] sm:$0xff]
          %vm574 = vcmask 261120
          %575 = vst.msk [vmem:[#allocation2] sm:$0xff] %vm574, %v572
          %576 = vst.msk [vmem:[#allocation2 + $0x8] sm:$0xff] %vm574, %v573
        $region72: #{tpu_custom_call.1} parent=59 // pred_fallthru
          _
        %v577 = vld [vmem:[#allocation2] sm:$0xff]
        %v578 = vld [vmem:[#allocation2 + $0x8] sm:$0xff]
        %v579 = vld [vmem:[%s449] sm:$0xf]
        %vm580 = vcmask 261120
        %v581 = vsel %vm580, %v577, 0.0
        %582 = vadd.xlane.f32.xlu0 %v581
        %v583 = vpop.xlane.xlu0 %582
        %v584 = vsel %vm580, %v578, 0.0
        %585 = vadd.xlane.f32.xlu0 %v584
        %v586 = vpop.xlane.xlu0 %585
        %v587 = vrcp.pop 32.0
        %v588 = vmul.f32 32.0, %v587
        %v589 = vsub.f32 1.0, %v588
        %v590 = vmul.f32 %v587, %v589
        %v591 = vadd.f32 %v587, %v590
        %vm592 = vweird.f32 %v587
        %v593 = vsel %vm592, %v587, %v591
        %v594 = vmul.f32 %v583, %v593
        %v595 = vmul.f32 %v586, %v593
        %v596 = vsub.f32 %v577, %v594
        %v597 = vsub.f32 %v578, %v595
        %v598 = vmul.f32 %v596, %v596
        %v599 = vmul.f32 %v597, %v597
        %v600 = vsel %vm580, %v598, 0.0
        %601 = vadd.xlane.f32.xlu0 %v600
        %v602 = vpop.xlane.xlu0 %601
        %v603 = vsel %vm580, %v599, 0.0
        %604 = vadd.xlane.f32.xlu0 %v603
        %v605 = vpop.xlane.xlu0 %604
        %v606 = vmul.f32 %v602, %v593
        %v607 = vmul.f32 %v605, %v593
        %v608 = vadd.f32 %v606, 1e-05
        %v609 = vadd.f32 %v607, 1e-05
        %v610 = vrsqrt.pop %v608
        %v611 = vmul.f32 %v610, %v608
        %v612 = vmul.f32 %v611, %v610
        %v613 = vmul.f32 0.5, %v612
        %v614 = vsub.f32 1.5, %v613
        %v615 = vmul.f32 %v610, %v614
        %vm616 = vweird.f32 %v608
        %vm617 = vweird.f32 %v610
        %vm618 = vmor %vm616, %vm617
        %v619 = vsel %vm618, %v610, %v615
        %v620 = vrsqrt.pop %v609
        %v621 = vmul.f32 %v620, %v609
        %v622 = vmul.f32 %v621, %v620
        %v623 = vmul.f32 0.5, %v622
        %v624 = vsub.f32 1.5, %v623
        %v625 = vmul.f32 %v620, %v624
        %vm626 = vweird.f32 %v609
        %vm627 = vweird.f32 %v620
        %vm628 = vmor %vm626, %vm627
        %v629 = vsel %vm628, %v620, %v625
        %v630 = vmul.f32 %v596, %v619
        %v631 = vmul.f32 %v597, %v629
        %v632 = vperm.slane %v579, 0
        %v633 = vmul.f32 %v630, %v632
        %v634 = vmul.f32 %v631, %v632
        %v635 = vperm.slane %v579, 1
        %v636 = vadd.f32 %v633, %v635
        %v637 = vadd.f32 %v634, %v635
        %639 = vrot.lane.b32.xlu0 %v637, 32
        %v640 = vpop.permute.xlu0 %639
        %v642 = vsel %vm580, %v636, %v640
        %v643 = vld [vmem:[%s542] sm:$0xff]
        %v644 = vld [vmem:[%s542 + $0x8] sm:$0xff]
        %v645 = vld [vmem:[%s542 + $0x10] sm:$0xff]
        %v646 = vld [vmem:[%s542 + $0x18] sm:$0xff]
        %v647 = vld [vmem:[%s459] sm:$0xff]
        %v648 = vld [vmem:[%s547] sm:$0xff]
        %v649 = vld [vmem:[%s547 + $0x8] sm:$0xff]
        %v650 = vld [vmem:[%s547 + $0x10] sm:$0xff]
        %v651 = vld [vmem:[%s547 + $0x18] sm:$0xff]
        %653 = vset.pattern.permute.xlu0 0
        %654 = vperm.xlu0 %653, %v648
        %v655 = vpop.permute.xlu0 %654
        %658 = vset.pattern.permute.xlu0 0
        %659 = vperm.xlu0 %658, %v649
        %v660 = vpop.permute.xlu0 %659
        %663 = vset.pattern.permute.xlu0 0
        %664 = vperm.xlu0 %663, %v650
        %v665 = vpop.permute.xlu0 %664
        %668 = vset.pattern.permute.xlu0 0
        %669 = vperm.xlu0 %668, %v651
        %v670 = vpop.permute.xlu0 %669
        %vm672 = vcmask 64512
        %v674 = vsel %vm672, %v643, 0
        %v677 = vsel %vm672, %v644, 0
        %v680 = vsel %vm672, %v645, 0
        %v683 = vsel %vm672, %v646, 0
        %685 = vmatpush.msra.mxu0 0.0
        %686 = vmatpush.msra.mxu0 0.0
        %687 = vmatpush.msra.mxu0 0.0
        %688 = vmatpush.msra.mxu0 0.0
        %689 = vmatpush.msra.mxu0 0.0
        %690 = vmatpush.msra.mxu0 0.0
        %691 = vmatpush.msra.mxu0 0.0
        %692 = vmatpush.msra.mxu0 0.0
        %693 = vmatpush.msra.mxu0 0.0
        %694 = vmatpush.msra.mxu0 0.0
        %695 = vmatpush.msra.mxu0 0.0
        %696 = vmatpush.msra.mxu0 0.0
        %697 = vmatpush.msra.mxu0 0.0
        %698 = vmatpush.msra.mxu0 0.0
        %699 = vmatpush.msra.mxu0 0.0
        %700 = vmatpush.msra.mxu0 %v642
        %701 = vmatmul.f32.gmra.mxu0 %v674
        %v702 = vpop.f32.mrf.mxu0
        %v703 = vadd.f32 %v655, %v702
        %704 = vmatmul.f32.gmra.mxu0 %v677
        %v705 = vpop.f32.mrf.mxu0
        %v706 = vadd.f32 %v660, %v705
        %707 = vmatmul.f32.gmra.mxu0 %v680
        %v708 = vpop.f32.mrf.mxu0
        %v709 = vadd.f32 %v665, %v708
        %710 = vmatmul.f32.gmra.mxu0 %v683
        %v711 = vpop.f32.mrf.mxu0
        %v712 = vadd.f32 %v670, %v711
        %713 = vdwg.mxu0
        %v714 = vmul.f32 %v703, 0.5
        %v715 = vmul.f32 %v706, 0.5
        %v716 = vmul.f32 %v709, 0.5
        %v717 = vmul.f32 %v712, 0.5
        %v718 = vmul.f32 %v703, 0.70710677
        %v719 = vmul.f32 %v706, 0.70710677
        %v720 = vmul.f32 %v709, 0.70710677
        %v721 = vmul.f32 %v712, 0.70710677
        %v722 = vmul.f32 %v718, %v718
        %v723 = vmin.f32 16.0, %v722
        %v724 = vmul.f32 %v723, 2.1237322e-06
        %v725 = vadd.f32 %v724, 0.00028619796
        %v726 = vmul.f32 %v723, %v725
        %v727 = vadd.f32 %v726, 0.0036580483
        %v728 = vmul.f32 %v723, %v727
        %v729 = vadd.f32 %v728, 0.05243302
        %v730 = vmul.f32 %v723, %v729
        %v731 = vadd.f32 %v730, 0.18741608
        %v732 = vmul.f32 %v723, %v731
        %v733 = vadd.f32 %v732, 1.1283791
        %v734 = vmul.f32 %v718, %v733
        %v735 = vmul.f32 %v723, 3.8918573e-05
        %v736 = vadd.f32 %v735, 0.001143296
        %v737 = vmul.f32 %v723, %v736
        %v738 = vadd.f32 %v737, 0.014752088
        %v739 = vmul.f32 %v723, %v738
        %v740 = vadd.f32 %v739, 0.112945676
        %v741 = vmul.f32 %v723, %v740
        %v742 = vadd.f32 %v741, 0.4994258
        %v743 = vmul.f32 %v723, %v742
        %v744 = vadd.f32 %v743, 1.0
        %v745 = vrcp.pop %v744
        %v746 = vmul.f32 %v744, %v745
        %v747 = vsub.f32 1.0, %v746
        %v748 = vmul.f32 %v745, %v747
        %v749 = vadd.f32 %v745, %v748
        %vm750 = vweird.f32 %v744
        %vm751 = vweird.f32 %v745
        %vm752 = vmor %vm750, %vm751
        %v753 = vsel %vm752, %v745, %v749
        %v754 = vand.u32 2147483647, %v744
        %vm755 = vcmp.eq.f32.partialorder %v754, 8.507059e+37
        %v756 = vand.u32 %v744, 2147483648
        %v757 = vor.u32 1.1754944e-38, %v756
        %v758 = vsel %vm755, %v757, %v753
        %v759 = vmul.f32 %v734, %v758
        %v760 = vmin.f32 %v759, 1.0
        %v761 = vmax.f32 %v760, -1.0
        %v762 = vmul.f32 %v719, %v719
        %v763 = vmin.f32 16.0, %v762
        %v764 = vmul.f32 %v763, 2.1237322e-06
        %v765 = vadd.f32 %v764, 0.00028619796
        %v766 = vmul.f32 %v763, %v765
        %v767 = vadd.f32 %v766, 0.0036580483
        %v768 = vmul.f32 %v763, %v767
        %v769 = vadd.f32 %v768, 0.05243302
        %v770 = vmul.f32 %v763, %v769
        %v771 = vadd.f32 %v770, 0.18741608
        %v772 = vmul.f32 %v763, %v771
        %v773 = vadd.f32 %v772, 1.1283791
        %v774 = vmul.f32 %v719, %v773
        %v775 = vmul.f32 %v763, 3.8918573e-05
        %v776 = vadd.f32 %v775, 0.001143296
        %v777 = vmul.f32 %v763, %v776
        %v778 = vadd.f32 %v777, 0.014752088
        %v779 = vmul.f32 %v763, %v778
        %v780 = vadd.f32 %v779, 0.112945676
        %v781 = vmul.f32 %v763, %v780
        %v782 = vadd.f32 %v781, 0.4994258
        %v783 = vmul.f32 %v763, %v782
        %v784 = vadd.f32 %v783, 1.0
        %v785 = vrcp.pop %v784
        %v786 = vmul.f32 %v784, %v785
        %v787 = vsub.f32 1.0, %v786
        %v788 = vmul.f32 %v785, %v787
        %v789 = vadd.f32 %v785, %v788
        %vm790 = vweird.f32 %v784
        %vm791 = vweird.f32 %v785
        %vm792 = vmor %vm790, %vm791
        %v793 = vsel %vm792, %v785, %v789
        %v794 = vand.u32 2147483647, %v784
        %vm795 = vcmp.eq.f32.partialorder %v794, 8.507059e+37
        %v796 = vand.u32 %v784, 2147483648
        %v797 = vor.u32 1.1754944e-38, %v796
        %v798 = vsel %vm795, %v797, %v793
        %v799 = vmul.f32 %v774, %v798
        %v800 = vmin.f32 %v799, 1.0
        %v801 = vmax.f32 %v800, -1.0
        %v802 = vmul.f32 %v720, %v720
        %v803 = vmin.f32 16.0, %v802
        %v804 = vmul.f32 %v803, 2.1237322e-06
        %v805 = vadd.f32 %v804, 0.00028619796
        %v806 = vmul.f32 %v803, %v805
        %v807 = vadd.f32 %v806, 0.0036580483
        %v808 = vmul.f32 %v803, %v807
        %v809 = vadd.f32 %v808, 0.05243302
        %v810 = vmul.f32 %v803, %v809
        %v811 = vadd.f32 %v810, 0.18741608
        %v812 = vmul.f32 %v803, %v811
        %v813 = vadd.f32 %v812, 1.1283791
        %v814 = vmul.f32 %v720, %v813
        %v815 = vmul.f32 %v803, 3.8918573e-05
        %v816 = vadd.f32 %v815, 0.001143296
        %v817 = vmul.f32 %v803, %v816
        %v818 = vadd.f32 %v817, 0.014752088
        %v819 = vmul.f32 %v803, %v818
        %v820 = vadd.f32 %v819, 0.112945676
        %v821 = vmul.f32 %v803, %v820
        %v822 = vadd.f32 %v821, 0.4994258
        %v823 = vmul.f32 %v803, %v822
        %v824 = vadd.f32 %v823, 1.0
        %v825 = vrcp.pop %v824
        %v826 = vmul.f32 %v824, %v825
        %v827 = vsub.f32 1.0, %v826
        %v828 = vmul.f32 %v825, %v827
        %v829 = vadd.f32 %v825, %v828
        %vm830 = vweird.f32 %v824
        %vm831 = vweird.f32 %v825
        %vm832 = vmor %vm830, %vm831
        %v833 = vsel %vm832, %v825, %v829
        %v834 = vand.u32 2147483647, %v824
        %vm835 = vcmp.eq.f32.partialorder %v834, 8.507059e+37
        %v836 = vand.u32 %v824, 2147483648
        %v837 = vor.u32 1.1754944e-38, %v836
        %v838 = vsel %vm835, %v837, %v833
        %v839 = vmul.f32 %v814, %v838
        %v840 = vmin.f32 %v839, 1.0
        %v841 = vmax.f32 %v840, -1.0
        %v842 = vmul.f32 %v721, %v721
        %v843 = vmin.f32 16.0, %v842
        %v844 = vmul.f32 %v843, 2.1237322e-06
        %v845 = vadd.f32 %v844, 0.00028619796
        %v846 = vmul.f32 %v843, %v845
        %v847 = vadd.f32 %v846, 0.0036580483
        %v848 = vmul.f32 %v843, %v847
        %v849 = vadd.f32 %v848, 0.05243302
        %v850 = vmul.f32 %v843, %v849
        %v851 = vadd.f32 %v850, 0.18741608
        %v852 = vmul.f32 %v843, %v851
        %v853 = vadd.f32 %v852, 1.1283791
        %v854 = vmul.f32 %v721, %v853
        %v855 = vmul.f32 %v843, 3.8918573e-05
        %v856 = vadd.f32 %v855, 0.001143296
        %v857 = vmul.f32 %v843, %v856
        %v858 = vadd.f32 %v857, 0.014752088
        %v859 = vmul.f32 %v843, %v858
        %v860 = vadd.f32 %v859, 0.112945676
        %v861 = vmul.f32 %v843, %v860
        %v862 = vadd.f32 %v861, 0.4994258
        %v863 = vmul.f32 %v843, %v862
        %v864 = vadd.f32 %v863, 1.0
        %v865 = vrcp.pop %v864
        %v866 = vmul.f32 %v864, %v865
        %v867 = vsub.f32 1.0, %v866
        %v868 = vmul.f32 %v865, %v867
        %v869 = vadd.f32 %v865, %v868
        %vm870 = vweird.f32 %v864
        %vm871 = vweird.f32 %v865
        %vm872 = vmor %vm870, %vm871
        %v873 = vsel %vm872, %v865, %v869
        %v874 = vand.u32 2147483647, %v864
        %vm875 = vcmp.eq.f32.partialorder %v874, 8.507059e+37
        %v876 = vand.u32 %v864, 2147483648
        %v877 = vor.u32 1.1754944e-38, %v876
        %v878 = vsel %vm875, %v877, %v873
        %v879 = vmul.f32 %v854, %v878
        %v880 = vmin.f32 %v879, 1.0
        %v881 = vmax.f32 %v880, -1.0
        %v882 = vadd.f32 %v761, 1.0
        %v883 = vadd.f32 %v801, 1.0
        %v884 = vadd.f32 %v841, 1.0
        %v885 = vadd.f32 %v881, 1.0
        %v886 = vmul.f32 %v714, %v882
        %v887 = vmul.f32 %v715, %v883
        %v888 = vmul.f32 %v716, %v884
        %v889 = vmul.f32 %v717, %v885
        %v890 = vld [vmem:[%s551] sm:$0xff]
        %892 = vset.pattern.permute.xlu0 0
        %893 = vperm.xlu0 %892, %v890
        %v894 = vpop.permute.xlu0 %893
        %v897 = vsel %vm580, %v647, 0
        %899 = vmatpush.msra.mxu0 0.0
        %900 = vmatpush.msra.mxu0 0.0
        %901 = vmatpush.msra.mxu0 0.0
        %902 = vmatpush.msra.mxu0 0.0
        %903 = vmatpush.msra.mxu0 0.0
        %904 = vmatpush.msra.mxu0 0.0
        %905 = vmatpush.msra.mxu0 0.0
        %906 = vmatpush.msra.mxu0 0.0
        %907 = vmatpush.msra.mxu0 0.0
        %908 = vmatpush.msra.mxu0 0.0
        %909 = vmatpush.msra.mxu0 0.0
        %910 = vmatpush.msra.mxu0 0.0
        %911 = vmatpush.msra.mxu0 %v889
        %912 = vmatpush.msra.mxu0 %v888
        %913 = vmatpush.msra.mxu0 %v887
        %914 = vmatpush.msra.mxu0 %v886
        %915 = vmatmul.f32.gmra.mxu0 %v897
        %v916 = vpop.f32.mrf.mxu0
        %v917 = vadd.f32 %v894, %v916
        %918 = vdwg.mxu0
        %920 = vrot.lane.b32.xlu0 %v917, 96
        %v921 = vpop.permute.xlu0 %920
        %v923 = vadd.f32 %v577, %v917
        %v924 = vadd.f32 %v578, %v921
        %v925 = vsel %vm580, %v923, 0.0
        %926 = vadd.xlane.f32.xlu0 %v925
        %v927 = vpop.xlane.xlu0 %926
        %v928 = vsel %vm580, %v924, 0.0
        %929 = vadd.xlane.f32.xlu0 %v928
        %v930 = vpop.xlane.xlu0 %929
        %v931 = vmul.f32 %v927, %v593
        %v932 = vmul.f32 %v930, %v593
        %v933 = vsub.f32 %v923, %v931
        %v934 = vsub.f32 %v924, %v932
        %v935 = vmul.f32 %v933, %v933
        %v936 = vmul.f32 %v934, %v934
        %v937 = vsel %vm580, %v935, 0.0
        %938 = vadd.xlane.f32.xlu0 %v937
        %v939 = vpop.xlane.xlu0 %938
        %v940 = vsel %vm580, %v936, 0.0
        %941 = vadd.xlane.f32.xlu0 %v940
        %v942 = vpop.xlane.xlu0 %941
        %v943 = vmul.f32 %v939, %v593
        %v944 = vmul.f32 %v942, %v593
        %v945 = vadd.f32 %v943, 1e-05
        %v946 = vadd.f32 %v944, 1e-05
        %v947 = vrsqrt.pop %v945
        %v948 = vmul.f32 %v947, %v945
        %v949 = vmul.f32 %v948, %v947
        %v950 = vmul.f32 0.5, %v949
        %v951 = vsub.f32 1.5, %v950
        %v952 = vmul.f32 %v947, %v951
        %vm953 = vweird.f32 %v945
        %vm954 = vweird.f32 %v947
        %vm955 = vmor %vm953, %vm954
        %v956 = vsel %vm955, %v947, %v952
        %v957 = vrsqrt.pop %v946
        %v958 = vmul.f32 %v957, %v946
        %v959 = vmul.f32 %v958, %v957
        %v960 = vmul.f32 0.5, %v959
        %v961 = vsub.f32 1.5, %v960
        %v962 = vmul.f32 %v957, %v961
        %vm963 = vweird.f32 %v946
        %vm964 = vweird.f32 %v957
        %vm965 = vmor %vm963, %vm964
        %v966 = vsel %vm965, %v957, %v962
        %v967 = vmul.f32 %v933, %v956
        %v968 = vmul.f32 %v934, %v966
        %v969 = vperm.slane %v579, 2
        %v970 = vmul.f32 %v967, %v969
        %v971 = vmul.f32 %v968, %v969
        %v972 = vperm.slane %v579, 3
        %v973 = vadd.f32 %v970, %v972
        %v974 = vadd.f32 %v971, %v972
        %v975 = vld [vmem:[%s556] sm:$0xff]
        %v976 = vld [vmem:[%s556 + $0x8] sm:$0xff]
        %v977 = vld [vmem:[%s556 + $0x10] sm:$0xff]
        %v978 = vld [vmem:[%s556 + $0x18] sm:$0xff]
        %v979 = vld [vmem:[%s564] sm:$0xff]
        %v980 = vld [vmem:[%s564 + $0x8] sm:$0xff]
        %v981 = vld [vmem:[%s564 + $0x10] sm:$0xff]
        %v982 = vld [vmem:[%s564 + $0x18] sm:$0xff]
        %v983 = vld [vmem:[%s559] sm:$0x1]
        %v985 = vperm.slane %v983, 0
        %v988 = vsel %vm580, %v973, 0
        %v991 = vsel %vm580, %v974, 0
        %993 = vmatpush.msra.mxu0 0.0
        %994 = vmatpush.msra.mxu0 0.0
        %995 = vmatpush.msra.mxu0 0.0
        %996 = vmatpush.msra.mxu0 0.0
        %997 = vmatpush.msra.mxu0 0.0
        %998 = vmatpush.msra.mxu0 0.0
        %999 = vmatpush.msra.mxu0 0.0
        %1000 = vmatpush.msra.mxu0 0.0
        %1001 = vmatpush.msra.mxu0 0.0
        %1002 = vmatpush.msra.mxu0 0.0
        %1003 = vmatpush.msra.mxu0 0.0
        %1004 = vmatpush.msra.mxu0 0.0
        %1005 = vmatpush.msra.mxu0 %v978
        %1006 = vmatpush.msra.mxu0 %v977
        %1007 = vmatpush.msra.mxu0 %v976
        %1008 = vmatpush.msra.mxu0 %v975
        %1009 = vmatmul.f32.gmra.mxu0 %v988
        %v1010 = vpop.f32.mrf.mxu0
        %v1011 = vadd.f32 %v985, %v1010
        %1012 = vmatmul.f32.gmra.mxu0 %v991
        %v1013 = vpop.f32.mrf.mxu0
        %v1014 = vadd.f32 %v985, %v1013
        %1015 = vdwg.mxu0
        %v1016 = vmul.f32 %v1011, 0.5
        %v1017 = vmul.f32 %v1014, 0.5
        %v1018 = vmul.f32 %v1011, 0.70710677
        %v1019 = vmul.f32 %v1014, 0.70710677
        %v1020 = vmul.f32 %v1018, %v1018
        %v1021 = vmin.f32 16.0, %v1020
        %v1022 = vmul.f32 %v1021, 2.1237322e-06
        %v1023 = vadd.f32 %v1022, 0.00028619796
        %v1024 = vmul.f32 %v1021, %v1023
        %v1025 = vadd.f32 %v1024, 0.0036580483
        %v1026 = vmul.f32 %v1021, %v1025
        %v1027 = vadd.f32 %v1026, 0.05243302
        %v1028 = vmul.f32 %v1021, %v1027
        %v1029 = vadd.f32 %v1028, 0.18741608
        %v1030 = vmul.f32 %v1021, %v1029
        %v1031 = vadd.f32 %v1030, 1.1283791
        %v1032 = vmul.f32 %v1018, %v1031
        %v1033 = vmul.f32 %v1021, 3.8918573e-05
        %v1034 = vadd.f32 %v1033, 0.001143296
        %v1035 = vmul.f32 %v1021, %v1034
        %v1036 = vadd.f32 %v1035, 0.014752088
        %v1037 = vmul.f32 %v1021, %v1036
        %v1038 = vadd.f32 %v1037, 0.112945676
        %v1039 = vmul.f32 %v1021, %v1038
        %v1040 = vadd.f32 %v1039, 0.4994258
        %v1041 = vmul.f32 %v1021, %v1040
        %v1042 = vadd.f32 %v1041, 1.0
        %v1043 = vrcp.pop %v1042
        %v1044 = vmul.f32 %v1042, %v1043
        %v1045 = vsub.f32 1.0, %v1044
        %v1046 = vmul.f32 %v1043, %v1045
        %v1047 = vadd.f32 %v1043, %v1046
        %vm1048 = vweird.f32 %v1042
        %vm1049 = vweird.f32 %v1043
        %vm1050 = vmor %vm1048, %vm1049
        %v1051 = vsel %vm1050, %v1043, %v1047
        %v1052 = vand.u32 2147483647, %v1042
        %vm1053 = vcmp.eq.f32.partialorder %v1052, 8.507059e+37
        %v1054 = vand.u32 %v1042, 2147483648
        %v1055 = vor.u32 1.1754944e-38, %v1054
        %v1056 = vsel %vm1053, %v1055, %v1051
        %v1057 = vmul.f32 %v1032, %v1056
        %v1058 = vmin.f32 %v1057, 1.0
        %v1059 = vmax.f32 %v1058, -1.0
        %v1060 = vmul.f32 %v1019, %v1019
        %v1061 = vmin.f32 16.0, %v1060
        %v1062 = vmul.f32 %v1061, 2.1237322e-06
        %v1063 = vadd.f32 %v1062, 0.00028619796
        %v1064 = vmul.f32 %v1061, %v1063
        %v1065 = vadd.f32 %v1064, 0.0036580483
        %v1066 = vmul.f32 %v1061, %v1065
        %v1067 = vadd.f32 %v1066, 0.05243302
        %v1068 = vmul.f32 %v1061, %v1067
        %v1069 = vadd.f32 %v1068, 0.18741608
        %v1070 = vmul.f32 %v1061, %v1069
        %v1071 = vadd.f32 %v1070, 1.1283791
        %v1072 = vmul.f32 %v1019, %v1071
        %v1073 = vmul.f32 %v1061, 3.8918573e-05
        %v1074 = vadd.f32 %v1073, 0.001143296
        %v1075 = vmul.f32 %v1061, %v1074
        %v1076 = vadd.f32 %v1075, 0.014752088
        %v1077 = vmul.f32 %v1061, %v1076
        %v1078 = vadd.f32 %v1077, 0.112945676
        %v1079 = vmul.f32 %v1061, %v1078
        %v1080 = vadd.f32 %v1079, 0.4994258
        %v1081 = vmul.f32 %v1061, %v1080
        %v1082 = vadd.f32 %v1081, 1.0
        %v1083 = vrcp.pop %v1082
        %v1084 = vmul.f32 %v1082, %v1083
        %v1085 = vsub.f32 1.0, %v1084
        %v1086 = vmul.f32 %v1083, %v1085
        %v1087 = vadd.f32 %v1083, %v1086
        %vm1088 = vweird.f32 %v1082
        %vm1089 = vweird.f32 %v1083
        %vm1090 = vmor %vm1088, %vm1089
        %v1091 = vsel %vm1090, %v1083, %v1087
        %v1092 = vand.u32 2147483647, %v1082
        %vm1093 = vcmp.eq.f32.partialorder %v1092, 8.507059e+37
        %v1094 = vand.u32 %v1082, 2147483648
        %v1095 = vor.u32 1.1754944e-38, %v1094
        %v1096 = vsel %vm1093, %v1095, %v1091
        %v1097 = vmul.f32 %v1072, %v1096
        %v1098 = vmin.f32 %v1097, 1.0
        %v1099 = vmax.f32 %v1098, -1.0
        %v1100 = vadd.f32 %v1059, 1.0
        %v1101 = vadd.f32 %v1099, 1.0
        %v1102 = vmul.f32 %v1016, %v1100
        %v1103 = vmul.f32 %v1017, %v1101
        %v1104 = vld [vmem:[%s567] sm:$0x1]
        %v1106 = vperm.slane %v1104, 0
        %v1109 = vsel %vm580, %v1102, 0
        %v1112 = vsel %vm580, %v1103, 0
        %1114 = vmatpush.msra.mxu0 0.0
        %1115 = vmatpush.msra.mxu0 0.0
        %1116 = vmatpush.msra.mxu0 0.0
        %1117 = vmatpush.msra.mxu0 0.0
        %1118 = vmatpush.msra.mxu0 0.0
        %1119 = vmatpush.msra.mxu0 0.0
        %1120 = vmatpush.msra.mxu0 0.0
        %1121 = vmatpush.msra.mxu0 0.0
        %1122 = vmatpush.msra.mxu0 0.0
        %1123 = vmatpush.msra.mxu0 0.0
        %1124 = vmatpush.msra.mxu0 0.0
        %1125 = vmatpush.msra.mxu0 0.0
        %1126 = vmatpush.msra.mxu0 %v982
        %1127 = vmatpush.msra.mxu0 %v981
        %1128 = vmatpush.msra.mxu0 %v980
        %1129 = vmatpush.msra.mxu0 %v979
        %1130 = vmatmul.f32.gmra.mxu0 %v1109
        %v1131 = vpop.f32.mrf.mxu0
        %v1132 = vadd.f32 %v1106, %v1131
        %1133 = vmatmul.f32.gmra.mxu0 %v1112
        %v1134 = vpop.f32.mrf.mxu0
        %v1135 = vadd.f32 %v1106, %v1134
        %1136 = vdwg.mxu0
        %v1137 = vadd.f32 %v923, %v1132
        %v1138 = vadd.f32 %v924, %v1135
        %1139 = vst.msk [vmem:[#allocation2] sm:$0xff] %vm580, %v1137
        %1140 = vst.msk [vmem:[#allocation2 + $0x8] sm:$0xff] %vm580, %v1138
        %p1141 = scmp.eq.s32.totalorder %s33, 1
        // Predicated region
        $region73: #{tpu_custom_call.1} parent=59 // pred_check
          %p1142 = pneg %p1141
        $region74: #{tpu_custom_call.1} parent=59 // pred_check_branch
          %1144 = sbr.rel (%p1142) target = $region76
        $region75: #{tpu_custom_call.1} parent=59 // pred_region
          %v1145 = vsel %vm580, %v1137, 0.0
          %v1146 = vrot.slane %v1145, 4
          %v1147 = vadd.f32 %v1145, %v1146
          %v1148 = vrot.slane %v1147, 2
          %v1149 = vadd.f32 %v1147, %v1148
          %v1150 = vrot.slane %v1149, 1
          %v1151 = vadd.f32 %v1149, %v1150
          %v1152 = vsel %vm580, %v1138, 0.0
          %v1153 = vrot.slane %v1152, 4
          %v1154 = vadd.f32 %v1152, %v1153
          %v1155 = vrot.slane %v1154, 2
          %v1156 = vadd.f32 %v1154, %v1155
          %v1157 = vrot.slane %v1156, 1
          %v1158 = vadd.f32 %v1156, %v1157
          %v1159 = vrcp.pop 8.0
          %v1160 = vmul.f32 8.0, %v1159
          %v1161 = vsub.f32 1.0, %v1160
          %v1162 = vmul.f32 %v1159, %v1161
          %v1163 = vadd.f32 %v1159, %v1162
          %vm1164 = vweird.f32 %v1159
          %v1165 = vsel %vm1164, %v1159, %v1163
          %v1166 = vmul.f32 %v1151, %v1165
          %v1167 = vmul.f32 %v1158, %v1165
          %vm1170 = vcmask 1041409
          %v1171 = vsel %vm1170, %v1167, %v1166
          %vm1173 = vcmask 254976
          %1174 = vst.msk [vmem:[#allocation8] sm:$0x3] %vm1173, %v1171
        $region76: #{tpu_custom_call.1} parent=59 // pred_fallthru
          _
        // Predicated region
        $region77: #{tpu_custom_call.1} parent=59 // pred_check
          %p1175 = pneg %p318
        $region78: #{tpu_custom_call.1} parent=59 // pred_check_branch
          %1177 = sbr.rel (%p1175) target = $region80
        $region79: #{tpu_custom_call.1} parent=59 // pred_region
          %1179 = vsyncadd [#allocation5], 0
          %s1180 = smul.addr %s32, 2
          %s1181 = scalar_lea.hbm %s10, %s1180
          %s1183 = sshll.u32 [#allocation8], 4
          %s1184 = int_to_ptr.vmem [resolvable:$true] %s1183
          %s1185 = sshll.u32 %s1181, 4
          %s1186 = int_to_ptr.hbm [resolvable:$true] %s1185
          %1188 = dma.vmem_to_hbm [thread:$0]  %s1184, 32, %s1186, [#allocation5]
        $region80: #{tpu_custom_call.1} parent=59 // pred_fallthru
          _
        // Predicated region
        $region81: #{tpu_custom_call.1} parent=59 // pred_check
          %p1189 = pneg %p318
        $region82: #{tpu_custom_call.1} parent=59 // pred_check_branch
          %1191 = sbr.rel (%p1189) target = $region84
        $region83: #{tpu_custom_call.1} parent=59 // pred_region
          %1193 = dma.done [#allocation5], 32
        $region84: #{tpu_custom_call.1} parent=59 // pred_fallthru
          _
      $region60: #{tpu_custom_call.1} parent=5 // pred_fallthru
        _
      %p1194 = scmp.le.s32.totalorder 2, %s23
      // Predicated region
      $region85: #{tpu_custom_call.1} parent=5 // pred_check
        %p1195 = pneg %p1194
      $region86: #{tpu_custom_call.1} parent=5 // pred_check_branch
        %1197 = sbr.rel (%p1195) target = $region88
      $region87: #{tpu_custom_call.1} parent=5 // pred_region
        %s1198 = ssub.s32 %s23, 2
      $region88: #{tpu_custom_call.1} parent=5 // pred_fallthru
        _
    $region6: #{tpu_custom_call.1} parent=1 // loop_footer
      %s27 = sadd.s32 1, %s23
    $region7: #{tpu_custom_call.1} parent=1 // loop_footer_branch
      %22 = sbr.rel target = $region3
    $region8: #{tpu_custom_call.1} parent=1 // loop_exit
      _
    %1199 = vsyncpa [#allocation4], 1
    %s1200 = scalar_lea.sflag [#allocation4], 1
    %1201 = vsyncpa %s1200, 1
    %1202 = vsyncpa [#allocation7], 1
    %s1203 = scalar_lea.sflag [#allocation7], 1
    %1204 = vsyncpa %s1203, 1
    %1205 = vsyncpa [#allocation5], 1
    %s1206 = scalar_lea.sflag [#allocation5], 1
    %1207 = vsyncpa %s1206, 1

</llo_original>
